<compile_context>
chip_gen: v7x
topology: tpu7x:2x2x1
jax: 0.10.0
libtpu: 0.0.40
codegen_flags: <defaults>
</compile_context>

<pallas_src>
from functools import partial

import jax
import jax.numpy as jnp
from jax.experimental import pallas as pl
from jax.experimental.pallas import tpu as pltpu


def _layernorm(z, g, b, eps=1e-5):
    mu = jnp.mean(z, axis=-1, keepdims=True)
    var = jnp.mean((z - mu) ** 2, axis=-1, keepdims=True)
    return (z - mu) * jax.lax.rsqrt(var + eps) * g + b


# Packed small-parameter row indices (see _fuse_params).
_LN1_G, _LN1_B, _LN2_G, _LN2_B, _B_OUT, _B_FC1, _B_FC2, _B_Q, _B_K, _B_V = range(10)


def transformer_block_kernel(num_heads, seq_len,
                             x_ref, p_ref, wqkv_ref, wout_ref, w1_ref, w2_ref,
                             o_ref, attn_scr):
    """One grid step = one batch tile; all Bt*S tokens flattened for token-wise matmuls."""
    T, E = x_ref.shape                      # T = Bt * S (flattened by the wrapper)
    H = num_heads
    S = seq_len
    Bt = T // S
    D = E // H

    x = x_ref[...]                           # (T, E) f32
    pv = p_ref[...]                          # (10, E) f32 packed LN params + biases
    g1, be1 = pv[_LN1_G:_LN1_G + 1, :], pv[_LN1_B:_LN1_B + 1, :]
    g2, be2 = pv[_LN2_G:_LN2_G + 1, :], pv[_LN2_B:_LN2_B + 1, :]
    b_out = pv[_B_OUT:_B_OUT + 1, :]
    b_fc1 = pv[_B_FC1:_B_FC1 + 1, :]
    b_fc2 = pv[_B_FC2:_B_FC2 + 1, :]

    # ---------- ResidualAdd(PreNorm(Attention)) ----------
    xn = _layernorm(x, g1, be1)                                      # f32
    # fused qkv ∘ in_proj projection (1/sqrt(D) scale + in_proj bias folded wrapper-side)
    qkv = jnp.dot(xn.astype(jnp.bfloat16), wqkv_ref[...],
                  preferred_element_type=jnp.float32)                # (T, 3E) f32

    # per-section biases applied here (packed as (1,E) rows -> no (1,3E) input needed)
    q = (qkv[:, :E] + pv[_B_Q:_B_Q + 1, :]).astype(jnp.bfloat16)
    k = (qkv[:, E:2 * E] + pv[_B_K:_B_K + 1, :]).astype(jnp.bfloat16)
    v = (qkv[:, 2 * E:] + pv[_B_V:_B_V + 1, :]).astype(jnp.bfloat16)

    # leading-dim split only (minor dim E unchanged -> free, no relayout)
    q3 = q.reshape(Bt, S, E)
    k3 = k.reshape(Bt, S, E)
    v3 = v.reshape(Bt, S, E)

    # Attention batched over the batch rows of the tile: no cross-batch mask, cost Bt*S^2.
    # Each head's (T, D) output lands in the (T, E) scratch at its lane offset so the
    # out-projection is ONE (T,E)x(E,E) matmul (no per-head K=8 matmuls, no concat).
    for h in range(H):                       # H small; per-head temps die at the scratch store
        sl = slice(h * D, (h + 1) * D)
        qh = q3[:, :, sl]                    # (Bt, S, D) bf16
        kh = k3[:, :, sl]
        vh = v3[:, :, sl]
        s = jnp.einsum('bqd,bkd->bqk', qh, kh,
                       preferred_element_type=jnp.float32)           # (Bt, S, S) f32
        s = s - jnp.max(s, axis=-1, keepdims=True)
        p = jnp.exp(s)
        inv = pl.reciprocal(jnp.sum(p, axis=-1, keepdims=True), approx=True)  # EUP slot
        p = (p * inv).astype(jnp.bfloat16)
        oh = jnp.einsum('bqk,bkd->bqd', p, vh,
                        preferred_element_type=jnp.float32)           # (Bt, S, D) f32
        attn_scr[:, sl] = oh.reshape(T, D)   # leading-dim merge + static lane-offset store

    ctx = jnp.dot(attn_scr[...].astype(jnp.bfloat16), wout_ref[...],
                  preferred_element_type=jnp.float32)                 # (T, E) f32
    x1 = x + ctx + b_out                                              # residual (f32)

    # ---------- ResidualAdd(PreNorm(MLP)) ----------
    xn2 = _layernorm(x1, g2, be2)
    h1 = jnp.dot(xn2.astype(jnp.bfloat16), w1_ref[...],
                 preferred_element_type=jnp.float32) + b_fc1
    h1 = jnp.maximum(h1, 0.0)                                         # ReLU (torchvision MLP)
    h2 = jnp.dot(h1.astype(jnp.bfloat16), w2_ref[...],
                 preferred_element_type=jnp.float32) + b_fc2

    o_ref[...] = (x1 + h2).astype(o_ref.dtype)


def _fuse_params(p, E, num_heads):
    """Wrapper-side weight fusion, bf16 cast of matmul weights, and small-param packing."""
    D = E // num_heads
    scale = 1.0 / (D ** 0.5)
    # effective q/k/v weights: (qkv Linear) then (MHA in_proj); 1/sqrt(D) folded into Q
    wq = (p["qkv_wt"][:, :E] @ p["in_wt"][:, :E]) * scale
    wk = p["qkv_wt"][:, E:2 * E] @ p["in_wt"][:, E:2 * E]
    wv = p["qkv_wt"][:, 2 * E:] @ p["in_wt"][:, 2 * E:]
    w_qkv = jnp.concatenate([wq, wk, wv], axis=1).astype(jnp.bfloat16)   # (E, 3E)

    # all (1, E)-shaped small params packed into a single (10, E) f32 block
    p_pack = jnp.concatenate(
        [p["ln1_g"], p["ln1_b"], p["ln2_g"], p["ln2_b"],
         p["out_b"], p["fc1_b"], p["fc2_b"],
         p["in_b"][:, :E] * scale, p["in_b"][:, E:2 * E], p["in_b"][:, 2 * E:]],
        axis=0).astype(jnp.float32)                                       # (10, E)

    return (p_pack, w_qkv,
            p["out_wt"].astype(jnp.bfloat16),
            p["fc1_wt"].astype(jnp.bfloat16),
            p["fc2_wt"].astype(jnp.bfloat16))


def _pick_batch_tile(B, S, E, vmem_budget_bytes=24 << 20):
    """Largest Bt dividing B with grid = B//Bt >= 2 (v7x megacore + DMA pipelining),
    subject to a conservative per-step VMEM budget (safe for v7x's 64 MiB VMEM)."""
    divisors = [d for d in range(1, B + 1) if B % d == 0]
    candidates = [d for d in divisors if B // d >= 2] or [B]

    def step_bytes(bt):
        t = bt * S
        return (4 * t * E * 4          # double-buffered in + out f32 blocks
                + t * 3 * E * 4        # qkv f32
                + 3 * t * E * 2        # q/k/v bf16
                + 2 * bt * S * S * 4   # per-head score + prob buffers (f32)
                + t * E * 4            # attention scratch
                + 4 * t * E * 4)       # x1 / xn2 / h1 / h2 f32 temporaries

    fitting = [d for d in candidates if step_bytes(d) <= vmem_budget_bytes]
    return max(fitting) if fitting else min(candidates)


def transformer_block(x_sbe, params, num_heads, batch_tile=None):
    """x_sbe: (S, B, E) float32 (PyTorch MultiheadAttention default layout)."""
    x = jnp.transpose(x_sbe, (1, 0, 2))                                   # (B, S, E)
    B, S, E = x.shape
    Bt = _pick_batch_tile(B, S, E) if batch_tile is None else batch_tile
    assert B % Bt == 0
    Tt = Bt * S

    x2d = x.reshape(B * S, E)                                             # wrapper-side flatten
    p_pack, w_qkv, w_out, w_fc1, w_fc2 = _fuse_params(params, E, num_heads)

    out2d = pl.pallas_call(
        partial(transformer_block_kernel, num_heads, S),
        out_shape=jax.ShapeDtypeStruct((B * S, E), x.dtype),
        grid_spec=pltpu.PrefetchScalarGridSpec(
            num_scalar_prefetch=0,
            grid=(B // Bt,),
            in_specs=[
                pl.BlockSpec((Tt, E), lambda g: (g, 0)),                  # x tokens
                pl.BlockSpec(p_pack.shape, lambda g: (0, 0)),             # packed LN/bias
                pl.BlockSpec(w_qkv.shape, lambda g: (0, 0)),              # fused qkv weight
                pl.BlockSpec(w_out.shape, lambda g: (0, 0)),              # out-proj weight
                pl.BlockSpec(w_fc1.shape, lambda g: (0, 0)),              # MLP fc1 weight
                pl.BlockSpec(w_fc2.shape, lambda g: (0, 0)),              # MLP fc2 weight
            ],
            out_specs=pl.BlockSpec((Tt, E), lambda g: (g, 0)),
            scratch_shapes=[pltpu.VMEM((Tt, E), jnp.float32)],            # per-head attn output
        ),
        compiler_params=pltpu.CompilerParams(
            dimension_semantics=("parallel",),        # batch tiles shard across v7x's two TCs
            vmem_limit_bytes=32 * 1024 * 1024,        # explicit; Bt selection budgets below this
        ),
    )(x2d, p_pack, w_qkv, w_out, w_fc1, w_fc2)

    out = out2d.reshape(B, S, E)
    return jnp.transpose(out, (1, 0, 2))                                  # back to (S, B, E)


def reference_block(x_sbe, p, num_heads):
    """Pure-JAX f32 reference mirroring the PyTorch forward (eval mode), unfused weights."""
    x = jnp.transpose(x_sbe, (1, 0, 2))                                   # (B, S, E)
    B, S, E = x.shape
    H = num_heads
    D = E // H
    scale = 1.0 / (D ** 0.5)

    xn = _layernorm(x, p["ln1_g"], p["ln1_b"])
    qkv = xn @ p["qkv_wt"]
    q_in, k_in, v_in = qkv[..., :E], qkv[..., E:2 * E], qkv[..., 2 * E:]
    q = q_in @ p["in_wt"][:, :E] + p["in_b"][:, :E]
    k = k_in @ p["in_wt"][:, E:2 * E] + p["in_b"][:, E:2 * E]
    v = v_in @ p["in_wt"][:, 2 * E:] + p["in_b"][:, 2 * E:]
    qh = q.reshape(B, S, H, D).transpose(0, 2, 1, 3) * scale
    kh = k.reshape(B, S, H, D).transpose(0, 2, 1, 3)
    vh = v.reshape(B, S, H, D).transpose(0, 2, 1, 3)
    s = jnp.einsum("bhqd,bhkd->bhqk", qh, kh)
    pmat = jax.nn.softmax(s, axis=-1)
    o = jnp.einsum("bhqk,bhkd->bhqd", pmat, vh).transpose(0, 2, 1, 3).reshape(B, S, E)
    x1 = x + (o @ p["out_wt"] + p["out_b"])

    xn2 = _layernorm(x1, p["ln2_g"], p["ln2_b"])
    h1 = jnp.maximum(xn2 @ p["fc1_wt"] + p["fc1_b"], 0.0)
    y = x1 + (h1 @ p["fc2_wt"] + p["fc2_b"])
    return jnp.transpose(y, (1, 0, 2))


def init_params(key, emb_size):
    E = emb_size
    ks = jax.random.split(key, 12)
    n = lambda k, shape, s=0.05: (s * jax.random.normal(k, shape)).astype(jnp.float32)
    return {
        # LayerNorm 1 / 2 (stored as (1, E) rows for clean VMEM layout / packing)
        "ln1_g": (1.0 + 0.1 * jax.random.normal(ks[0], (1, E))).astype(jnp.float32),
        "ln1_b": n(ks[1], (1, E)),
        "ln2_g": (1.0 + 0.1 * jax.random.normal(ks[2], (1, E))).astype(jnp.float32),
        "ln2_b": n(ks[3], (1, E)),
        # qkv Linear(E, 3E, bias=False): PyTorch weight (3E, E) -> transposed (E, 3E)
        "qkv_wt": n(ks[4], (E, 3 * E)),
        # MultiheadAttention in_proj (3E, E) -> (E, 3E), bias (3E,) -> (1, 3E)
        "in_wt": n(ks[5], (E, 3 * E)),
        "in_b": n(ks[6], (1, 3 * E)),
        # MultiheadAttention out_proj (E, E) -> (E, E), bias (1, E)
        "out_wt": n(ks[7], (E, E)),
        "out_b": n(ks[8], (1, E)),
        # MLP: Linear(E, E) x2 (weights pre-transposed)
        "fc1_wt": n(ks[9], (E, E)),
        "fc1_b": n(ks[10], (1, E)),
        "fc2_wt": n(ks[11], (E, E)),
        "fc2_b": jnp.zeros((1, E), jnp.float32),
    }


if __name__ == "__main__":
    emb_size = 32
    num_heads = 4
    seq, batch = 8, 2

    key = jax.random.PRNGKey(0)
    k_x, k_p = jax.random.split(key)
    x = jax.random.normal(k_x, (seq, batch, emb_size), dtype=jnp.float32)   # (S, B, E)
    params = init_params(k_p, emb_size)

    out = jax.block_until_ready(transformer_block(x, params, num_heads))    # grid = 2 here
    ref = jax.block_until_ready(reference_block(x, params, num_heads))

    assert out.shape == (seq, batch, emb_size)
    assert jnp.all(jnp.isfinite(out))
    assert jnp.allclose(out, ref, atol=1e-2, rtol=1e-2), float(jnp.max(jnp.abs(out - ref)))

    print("KERNEL_OK")
</pallas_src>

<mosaic_0001>
module attributes {stable_mosaic.version = 11 : i64} {
  func.func @transformer_block_kernel(%arg0: i32, %arg1: memref<8x32xf32, #tpu.memory_space<vmem>>, %arg2: memref<10x32xf32, #tpu.memory_space<vmem>>, %arg3: memref<32x96xbf16, #tpu.memory_space<vmem>>, %arg4: memref<32x32xbf16, #tpu.memory_space<vmem>>, %arg5: memref<32x32xbf16, #tpu.memory_space<vmem>>, %arg6: memref<32x32xbf16, #tpu.memory_space<vmem>>, %arg7: memref<8x32xf32, #tpu.memory_space<vmem>>, %arg8: memref<8x32xf32, #tpu.memory_space<vmem>>) attributes {dimension_semantics = [#tpu.dimension_semantics<parallel>], iteration_bounds = array<i64: 2>, scalar_prefetch = 0 : i64, scratch_operands = 1 : i64, tpu.core_type = #tpu.core_type<tc>, window_params = [{transform_indices = @transform_0, window_bounds = array<i64: 8, 32>}, {pipeline_mode = #tpu.pipeline_mode<synchronous>, transform_indices = @transform_1, window_bounds = array<i64: 10, 32>}, {pipeline_mode = #tpu.pipeline_mode<synchronous>, transform_indices = @transform_2, window_bounds = array<i64: 32, 96>}, {pipeline_mode = #tpu.pipeline_mode<synchronous>, transform_indices = @transform_3, window_bounds = array<i64: 32, 32>}, {pipeline_mode = #tpu.pipeline_mode<synchronous>, transform_indices = @transform_4, window_bounds = array<i64: 32, 32>}, {pipeline_mode = #tpu.pipeline_mode<synchronous>, transform_indices = @transform_5, window_bounds = array<i64: 32, 32>}, {transform_indices = @transform_6, window_bounds = array<i64: 8, 32>}]} {
    %c0 = arith.constant 0 : index
    %c0_0 = arith.constant 0 : index
    %0 = vector.load %arg1[%c0, %c0_0] : memref<8x32xf32, #tpu.memory_space<vmem>>, vector<8x32xf32>
    %c0_1 = arith.constant 0 : index
    %c0_2 = arith.constant 0 : index
    %1 = vector.load %arg2[%c0_1, %c0_2] : memref<10x32xf32, #tpu.memory_space<vmem>>, vector<10x32xf32>
    %2 = vector.extract_strided_slice %1 {offsets = [0, 0], sizes = [1, 32], strides = [1, 1]} : vector<10x32xf32> to vector<1x32xf32>
    %3 = vector.extract_strided_slice %1 {offsets = [1, 0], sizes = [1, 32], strides = [1, 1]} : vector<10x32xf32> to vector<1x32xf32>
    %4 = vector.extract_strided_slice %1 {offsets = [2, 0], sizes = [1, 32], strides = [1, 1]} : vector<10x32xf32> to vector<1x32xf32>
    %5 = vector.extract_strided_slice %1 {offsets = [3, 0], sizes = [1, 32], strides = [1, 1]} : vector<10x32xf32> to vector<1x32xf32>
    %6 = vector.extract_strided_slice %1 {offsets = [4, 0], sizes = [1, 32], strides = [1, 1]} : vector<10x32xf32> to vector<1x32xf32>
    %7 = vector.extract_strided_slice %1 {offsets = [5, 0], sizes = [1, 32], strides = [1, 1]} : vector<10x32xf32> to vector<1x32xf32>
    %8 = vector.extract_strided_slice %1 {offsets = [6, 0], sizes = [1, 32], strides = [1, 1]} : vector<10x32xf32> to vector<1x32xf32>
    %cst = arith.constant dense<0.000000e+00> : vector<8xf32>
    %9 = vector.multi_reduction <add>, %0, %cst [1] : vector<8x32xf32> to vector<8xf32>
    %10 = vector.shape_cast %9 : vector<8xf32> to vector<8x1xf32>
    %cst_3 = arith.constant 3.200000e+01 : f32
    %11 = vector.broadcast %cst_3 : f32 to vector<8x1xf32>
    %12 = arith.divf %10, %11 : vector<8x1xf32>
    %13 = vector.broadcast %12 : vector<8x1xf32> to vector<8x32xf32>
    %14 = arith.subf %0, %13 : vector<8x32xf32>
    %15 = arith.mulf %14, %14 : vector<8x32xf32>
    %cst_4 = arith.constant dense<0.000000e+00> : vector<8xf32>
    %16 = vector.multi_reduction <add>, %15, %cst_4 [1] : vector<8x32xf32> to vector<8xf32>
    %17 = vector.shape_cast %16 : vector<8xf32> to vector<8x1xf32>
    %cst_5 = arith.constant 3.200000e+01 : f32
    %18 = vector.broadcast %cst_5 : f32 to vector<8x1xf32>
    %19 = arith.divf %17, %18 : vector<8x1xf32>
    %20 = vector.broadcast %12 : vector<8x1xf32> to vector<8x32xf32>
    %21 = arith.subf %0, %20 : vector<8x32xf32>
    %cst_6 = arith.constant 9.99999974E-6 : f32
    %22 = vector.broadcast %cst_6 : f32 to vector<8x1xf32>
    %23 = arith.addf %19, %22 : vector<8x1xf32>
    %24 = math.rsqrt %23 : vector<8x1xf32>
    %25 = vector.broadcast %24 : vector<8x1xf32> to vector<8x32xf32>
    %26 = arith.mulf %21, %25 : vector<8x32xf32>
    %27 = vector.broadcast %2 : vector<1x32xf32> to vector<8x32xf32>
    %28 = arith.mulf %26, %27 : vector<8x32xf32>
    %29 = vector.broadcast %3 : vector<1x32xf32> to vector<8x32xf32>
    %30 = arith.addf %28, %29 : vector<8x32xf32>
    %31 = arith.truncf %30 : vector<8x32xf32> to vector<8x32xbf16>
    %c0_7 = arith.constant 0 : index
    %c0_8 = arith.constant 0 : index
    %32 = vector.load %arg3[%c0_7, %c0_8] : memref<32x96xbf16, #tpu.memory_space<vmem>>, vector<32x96xbf16>
    %cst_9 = arith.constant dense<0.000000e+00> : vector<8x96xf32>
    %33 = tpu.matmul %31, %32, %cst_9 {dimension_numbers = #tpu.dot_dimension_numbers<[1], [0], [0], [1], [0, 0, 1, 1], [], []>} : vector<8x32xbf16>, vector<32x96xbf16>, vector<8x96xf32> -> vector<8x96xf32>
    %34 = vector.extract_strided_slice %33 {offsets = [0, 0], sizes = [8, 32], strides = [1, 1]} : vector<8x96xf32> to vector<8x32xf32>
    %35 = vector.extract_strided_slice %1 {offsets = [7, 0], sizes = [1, 32], strides = [1, 1]} : vector<10x32xf32> to vector<1x32xf32>
    %36 = vector.broadcast %35 : vector<1x32xf32> to vector<8x32xf32>
    %37 = arith.addf %34, %36 : vector<8x32xf32>
    %38 = arith.truncf %37 : vector<8x32xf32> to vector<8x32xbf16>
    %39 = vector.extract_strided_slice %33 {offsets = [0, 32], sizes = [8, 32], strides = [1, 1]} : vector<8x96xf32> to vector<8x32xf32>
    %40 = vector.extract_strided_slice %1 {offsets = [8, 0], sizes = [1, 32], strides = [1, 1]} : vector<10x32xf32> to vector<1x32xf32>
    %41 = vector.broadcast %40 : vector<1x32xf32> to vector<8x32xf32>
    %42 = arith.addf %39, %41 : vector<8x32xf32>
    %43 = arith.truncf %42 : vector<8x32xf32> to vector<8x32xbf16>
    %44 = vector.extract_strided_slice %33 {offsets = [0, 64], sizes = [8, 32], strides = [1, 1]} : vector<8x96xf32> to vector<8x32xf32>
    %45 = vector.extract_strided_slice %1 {offsets = [9, 0], sizes = [1, 32], strides = [1, 1]} : vector<10x32xf32> to vector<1x32xf32>
    %46 = vector.broadcast %45 : vector<1x32xf32> to vector<8x32xf32>
    %47 = arith.addf %44, %46 : vector<8x32xf32>
    %48 = arith.truncf %47 : vector<8x32xf32> to vector<8x32xbf16>
    %49 = vector.shape_cast %38 : vector<8x32xbf16> to vector<1x8x32xbf16>
    %50 = vector.shape_cast %43 : vector<8x32xbf16> to vector<1x8x32xbf16>
    %51 = vector.shape_cast %48 : vector<8x32xbf16> to vector<1x8x32xbf16>
    %52 = vector.extract_strided_slice %49 {offsets = [0, 0, 0], sizes = [1, 8, 8], strides = [1, 1, 1]} : vector<1x8x32xbf16> to vector<1x8x8xbf16>
    %53 = vector.extract_strided_slice %50 {offsets = [0, 0, 0], sizes = [1, 8, 8], strides = [1, 1, 1]} : vector<1x8x32xbf16> to vector<1x8x8xbf16>
    %54 = vector.extract_strided_slice %51 {offsets = [0, 0, 0], sizes = [1, 8, 8], strides = [1, 1, 1]} : vector<1x8x32xbf16> to vector<1x8x8xbf16>
    "tpu.trace_start"() <{level = 10 : i32, message = "bqd,bkd->bqk"}> : () -> ()
    %cst_10 = arith.constant dense<0.000000e+00> : vector<1x8x8xf32>
    %55 = tpu.matmul %52, %53, %cst_10 {dimension_numbers = #tpu.dot_dimension_numbers<[2], [2], [1], [1], [0, 0, 0, 1, 1, 1], [0], [0]>} : vector<1x8x8xbf16>, vector<1x8x8xbf16>, vector<1x8x8xf32> -> vector<1x8x8xf32>
    "tpu.trace_stop"() : () -> ()
    %cst_11 = arith.constant dense<0xFF800000> : vector<1x8xf32>
    %56 = vector.multi_reduction <maximumf>, %55, %cst_11 [2] : vector<1x8x8xf32> to vector<1x8xf32>
    %57 = vector.shape_cast %56 : vector<1x8xf32> to vector<1x8x1xf32>
    %58 = vector.broadcast %57 : vector<1x8x1xf32> to vector<1x8x8xf32>
    %59 = arith.subf %55, %58 : vector<1x8x8xf32>
    %60 = math.exp %59 : vector<1x8x8xf32>
    %cst_12 = arith.constant dense<0.000000e+00> : vector<1x8xf32>
    %61 = vector.multi_reduction <add>, %60, %cst_12 [2] : vector<1x8x8xf32> to vector<1x8xf32>
    %62 = vector.shape_cast %61 : vector<1x8xf32> to vector<1x8x1xf32>
    %63 = tpu.reciprocal %62 {approx = true} : vector<1x8x1xf32> -> vector<1x8x1xf32>
    %64 = vector.broadcast %63 : vector<1x8x1xf32> to vector<1x8x8xf32>
    %65 = arith.mulf %60, %64 : vector<1x8x8xf32>
    %66 = arith.truncf %65 : vector<1x8x8xf32> to vector<1x8x8xbf16>
    "tpu.trace_start"() <{level = 10 : i32, message = "bqk,bkd->bqd"}> : () -> ()
    %cst_13 = arith.constant dense<0.000000e+00> : vector<1x8x8xf32>
    %67 = tpu.matmul %66, %54, %cst_13 {dimension_numbers = #tpu.dot_dimension_numbers<[2], [1], [1], [2], [0, 0, 0, 1, 1, 2], [0], [0]>} : vector<1x8x8xbf16>, vector<1x8x8xbf16>, vector<1x8x8xf32> -> vector<1x8x8xf32>
    "tpu.trace_stop"() : () -> ()
    %68 = vector.shape_cast %67 : vector<1x8x8xf32> to vector<8x8xf32>
    %c0_14 = arith.constant 0 : index
    %c0_15 = arith.constant 0 : index
    %69 = vector.load %arg8[%c0_14, %c0_15] : memref<8x32xf32, #tpu.memory_space<vmem>>, vector<8x8xf32>
    tpu.vector_store %arg8[%c0_14, %c0_15], %68 {strides = array<i32>} : memref<8x32xf32, #tpu.memory_space<vmem>>, vector<8x8xf32>,
    %70 = vector.extract_strided_slice %49 {offsets = [0, 0, 8], sizes = [1, 8, 8], strides = [1, 1, 1]} : vector<1x8x32xbf16> to vector<1x8x8xbf16>
    %71 = vector.extract_strided_slice %50 {offsets = [0, 0, 8], sizes = [1, 8, 8], strides = [1, 1, 1]} : vector<1x8x32xbf16> to vector<1x8x8xbf16>
    %72 = vector.extract_strided_slice %51 {offsets = [0, 0, 8], sizes = [1, 8, 8], strides = [1, 1, 1]} : vector<1x8x32xbf16> to vector<1x8x8xbf16>
    "tpu.trace_start"() <{level = 10 : i32, message = "bqd,bkd->bqk"}> : () -> ()
    %cst_16 = arith.constant dense<0.000000e+00> : vector<1x8x8xf32>
    %73 = tpu.matmul %70, %71, %cst_16 {dimension_numbers = #tpu.dot_dimension_numbers<[2], [2], [1], [1], [0, 0, 0, 1, 1, 1], [0], [0]>} : vector<1x8x8xbf16>, vector<1x8x8xbf16>, vector<1x8x8xf32> -> vector<1x8x8xf32>
    "tpu.trace_stop"() : () -> ()
    %cst_17 = arith.constant dense<0xFF800000> : vector<1x8xf32>
    %74 = vector.multi_reduction <maximumf>, %73, %cst_17 [2] : vector<1x8x8xf32> to vector<1x8xf32>
    %75 = vector.shape_cast %74 : vector<1x8xf32> to vector<1x8x1xf32>
    %76 = vector.broadcast %75 : vector<1x8x1xf32> to vector<1x8x8xf32>
    %77 = arith.subf %73, %76 : vector<1x8x8xf32>
    %78 = math.exp %77 : vector<1x8x8xf32>
    %cst_18 = arith.constant dense<0.000000e+00> : vector<1x8xf32>
    %79 = vector.multi_reduction <add>, %78, %cst_18 [2] : vector<1x8x8xf32> to vector<1x8xf32>
    %80 = vector.shape_cast %79 : vector<1x8xf32> to vector<1x8x1xf32>
    %81 = tpu.reciprocal %80 {approx = true} : vector<1x8x1xf32> -> vector<1x8x1xf32>
    %82 = vector.broadcast %81 : vector<1x8x1xf32> to vector<1x8x8xf32>
    %83 = arith.mulf %78, %82 : vector<1x8x8xf32>
    %84 = arith.truncf %83 : vector<1x8x8xf32> to vector<1x8x8xbf16>
    "tpu.trace_start"() <{level = 10 : i32, message = "bqk,bkd->bqd"}> : () -> ()
    %cst_19 = arith.constant dense<0.000000e+00> : vector<1x8x8xf32>
    %85 = tpu.matmul %84, %72, %cst_19 {dimension_numbers = #tpu.dot_dimension_numbers<[2], [1], [1], [2], [0, 0, 0, 1, 1, 2], [0], [0]>} : vector<1x8x8xbf16>, vector<1x8x8xbf16>, vector<1x8x8xf32> -> vector<1x8x8xf32>
    "tpu.trace_stop"() : () -> ()
    %86 = vector.shape_cast %85 : vector<1x8x8xf32> to vector<8x8xf32>
    %c0_20 = arith.constant 0 : index
    %c8 = arith.constant 8 : index
    %87 = vector.load %arg8[%c0_20, %c8] : memref<8x32xf32, #tpu.memory_space<vmem>>, vector<8x8xf32>
    tpu.vector_store %arg8[%c0_20, %c8], %86 {strides = array<i32>} : memref<8x32xf32, #tpu.memory_space<vmem>>, vector<8x8xf32>,
    %88 = vector.extract_strided_slice %49 {offsets = [0, 0, 16], sizes = [1, 8, 8], strides = [1, 1, 1]} : vector<1x8x32xbf16> to vector<1x8x8xbf16>
    %89 = vector.extract_strided_slice %50 {offsets = [0, 0, 16], sizes = [1, 8, 8], strides = [1, 1, 1]} : vector<1x8x32xbf16> to vector<1x8x8xbf16>
    %90 = vector.extract_strided_slice %51 {offsets = [0, 0, 16], sizes = [1, 8, 8], strides = [1, 1, 1]} : vector<1x8x32xbf16> to vector<1x8x8xbf16>
    "tpu.trace_start"() <{level = 10 : i32, message = "bqd,bkd->bqk"}> : () -> ()
    %cst_21 = arith.constant dense<0.000000e+00> : vector<1x8x8xf32>
    %91 = tpu.matmul %88, %89, %cst_21 {dimension_numbers = #tpu.dot_dimension_numbers<[2], [2], [1], [1], [0, 0, 0, 1, 1, 1], [0], [0]>} : vector<1x8x8xbf16>, vector<1x8x8xbf16>, vector<1x8x8xf32> -> vector<1x8x8xf32>
    "tpu.trace_stop"() : () -> ()
    %cst_22 = arith.constant dense<0xFF800000> : vector<1x8xf32>
    %92 = vector.multi_reduction <maximumf>, %91, %cst_22 [2] : vector<1x8x8xf32> to vector<1x8xf32>
    %93 = vector.shape_cast %92 : vector<1x8xf32> to vector<1x8x1xf32>
    %94 = vector.broadcast %93 : vector<1x8x1xf32> to vector<1x8x8xf32>
    %95 = arith.subf %91, %94 : vector<1x8x8xf32>
    %96 = math.exp %95 : vector<1x8x8xf32>
    %cst_23 = arith.constant dense<0.000000e+00> : vector<1x8xf32>
    %97 = vector.multi_reduction <add>, %96, %cst_23 [2] : vector<1x8x8xf32> to vector<1x8xf32>
    %98 = vector.shape_cast %97 : vector<1x8xf32> to vector<1x8x1xf32>
    %99 = tpu.reciprocal %98 {approx = true} : vector<1x8x1xf32> -> vector<1x8x1xf32>
    %100 = vector.broadcast %99 : vector<1x8x1xf32> to vector<1x8x8xf32>
    %101 = arith.mulf %96, %100 : vector<1x8x8xf32>
    %102 = arith.truncf %101 : vector<1x8x8xf32> to vector<1x8x8xbf16>
    "tpu.trace_start"() <{level = 10 : i32, message = "bqk,bkd->bqd"}> : () -> ()
    %cst_24 = arith.constant dense<0.000000e+00> : vector<1x8x8xf32>
    %103 = tpu.matmul %102, %90, %cst_24 {dimension_numbers = #tpu.dot_dimension_numbers<[2], [1], [1], [2], [0, 0, 0, 1, 1, 2], [0], [0]>} : vector<1x8x8xbf16>, vector<1x8x8xbf16>, vector<1x8x8xf32> -> vector<1x8x8xf32>
    "tpu.trace_stop"() : () -> ()
    %104 = vector.shape_cast %103 : vector<1x8x8xf32> to vector<8x8xf32>
    %c0_25 = arith.constant 0 : index
    %c16 = arith.constant 16 : index
    %105 = vector.load %arg8[%c0_25, %c16] : memref<8x32xf32, #tpu.memory_space<vmem>>, vector<8x8xf32>
    tpu.vector_store %arg8[%c0_25, %c16], %104 {strides = array<i32>} : memref<8x32xf32, #tpu.memory_space<vmem>>, vector<8x8xf32>,
    %106 = vector.extract_strided_slice %49 {offsets = [0, 0, 24], sizes = [1, 8, 8], strides = [1, 1, 1]} : vector<1x8x32xbf16> to vector<1x8x8xbf16>
    %107 = vector.extract_strided_slice %50 {offsets = [0, 0, 24], sizes = [1, 8, 8], strides = [1, 1, 1]} : vector<1x8x32xbf16> to vector<1x8x8xbf16>
    %108 = vector.extract_strided_slice %51 {offsets = [0, 0, 24], sizes = [1, 8, 8], strides = [1, 1, 1]} : vector<1x8x32xbf16> to vector<1x8x8xbf16>
    "tpu.trace_start"() <{level = 10 : i32, message = "bqd,bkd->bqk"}> : () -> ()
    %cst_26 = arith.constant dense<0.000000e+00> : vector<1x8x8xf32>
    %109 = tpu.matmul %106, %107, %cst_26 {dimension_numbers = #tpu.dot_dimension_numbers<[2], [2], [1], [1], [0, 0, 0, 1, 1, 1], [0], [0]>} : vector<1x8x8xbf16>, vector<1x8x8xbf16>, vector<1x8x8xf32> -> vector<1x8x8xf32>
    "tpu.trace_stop"() : () -> ()
    %cst_27 = arith.constant dense<0xFF800000> : vector<1x8xf32>
    %110 = vector.multi_reduction <maximumf>, %109, %cst_27 [2] : vector<1x8x8xf32> to vector<1x8xf32>
    %111 = vector.shape_cast %110 : vector<1x8xf32> to vector<1x8x1xf32>
    %112 = vector.broadcast %111 : vector<1x8x1xf32> to vector<1x8x8xf32>
    %113 = arith.subf %109, %112 : vector<1x8x8xf32>
    %114 = math.exp %113 : vector<1x8x8xf32>
    %cst_28 = arith.constant dense<0.000000e+00> : vector<1x8xf32>
    %115 = vector.multi_reduction <add>, %114, %cst_28 [2] : vector<1x8x8xf32> to vector<1x8xf32>
    %116 = vector.shape_cast %115 : vector<1x8xf32> to vector<1x8x1xf32>
    %117 = tpu.reciprocal %116 {approx = true} : vector<1x8x1xf32> -> vector<1x8x1xf32>
    %118 = vector.broadcast %117 : vector<1x8x1xf32> to vector<1x8x8xf32>
    %119 = arith.mulf %114, %118 : vector<1x8x8xf32>
    %120 = arith.truncf %119 : vector<1x8x8xf32> to vector<1x8x8xbf16>
    "tpu.trace_start"() <{level = 10 : i32, message = "bqk,bkd->bqd"}> : () -> ()
    %cst_29 = arith.constant dense<0.000000e+00> : vector<1x8x8xf32>
    %121 = tpu.matmul %120, %108, %cst_29 {dimension_numbers = #tpu.dot_dimension_numbers<[2], [1], [1], [2], [0, 0, 0, 1, 1, 2], [0], [0]>} : vector<1x8x8xbf16>, vector<1x8x8xbf16>, vector<1x8x8xf32> -> vector<1x8x8xf32>
    "tpu.trace_stop"() : () -> ()
    %122 = vector.shape_cast %121 : vector<1x8x8xf32> to vector<8x8xf32>
    %c0_30 = arith.constant 0 : index
    %c24 = arith.constant 24 : index
    %123 = vector.load %arg8[%c0_30, %c24] : memref<8x32xf32, #tpu.memory_space<vmem>>, vector<8x8xf32>
    tpu.vector_store %arg8[%c0_30, %c24], %122 {strides = array<i32>} : memref<8x32xf32, #tpu.memory_space<vmem>>, vector<8x8xf32>,
    %c0_31 = arith.constant 0 : index
    %c0_32 = arith.constant 0 : index
    %124 = vector.load %arg8[%c0_31, %c0_32] : memref<8x32xf32, #tpu.memory_space<vmem>>, vector<8x32xf32>
    %125 = arith.truncf %124 : vector<8x32xf32> to vector<8x32xbf16>
    %c0_33 = arith.constant 0 : index
    %c0_34 = arith.constant 0 : index
    %126 = vector.load %arg4[%c0_33, %c0_34] : memref<32x32xbf16, #tpu.memory_space<vmem>>, vector<32x32xbf16>
    %cst_35 = arith.constant dense<0.000000e+00> : vector<8x32xf32>
    %127 = tpu.matmul %125, %126, %cst_35 {dimension_numbers = #tpu.dot_dimension_numbers<[1], [0], [0], [1], [0, 0, 1, 1], [], []>} : vector<8x32xbf16>, vector<32x32xbf16>, vector<8x32xf32> -> vector<8x32xf32>
    %128 = arith.addf %0, %127 : vector<8x32xf32>
    %129 = vector.broadcast %6 : vector<1x32xf32> to vector<8x32xf32>
    %130 = arith.addf %128, %129 : vector<8x32xf32>
    %cst_36 = arith.constant dense<0.000000e+00> : vector<8xf32>
    %131 = vector.multi_reduction <add>, %130, %cst_36 [1] : vector<8x32xf32> to vector<8xf32>
    %132 = vector.shape_cast %131 : vector<8xf32> to vector<8x1xf32>
    %cst_37 = arith.constant 3.200000e+01 : f32
    %133 = vector.broadcast %cst_37 : f32 to vector<8x1xf32>
    %134 = arith.divf %132, %133 : vector<8x1xf32>
    %135 = vector.broadcast %134 : vector<8x1xf32> to vector<8x32xf32>
    %136 = arith.subf %130, %135 : vector<8x32xf32>
    %137 = arith.mulf %136, %136 : vector<8x32xf32>
    %cst_38 = arith.constant dense<0.000000e+00> : vector<8xf32>
    %138 = vector.multi_reduction <add>, %137, %cst_38 [1] : vector<8x32xf32> to vector<8xf32>
    %139 = vector.shape_cast %138 : vector<8xf32> to vector<8x1xf32>
    %cst_39 = arith.constant 3.200000e+01 : f32
    %140 = vector.broadcast %cst_39 : f32 to vector<8x1xf32>
    %141 = arith.divf %139, %140 : vector<8x1xf32>
    %142 = vector.broadcast %134 : vector<8x1xf32> to vector<8x32xf32>
    %143 = arith.subf %130, %142 : vector<8x32xf32>
    %cst_40 = arith.constant 9.99999974E-6 : f32
    %144 = vector.broadcast %cst_40 : f32 to vector<8x1xf32>
    %145 = arith.addf %141, %144 : vector<8x1xf32>
    %146 = math.rsqrt %145 : vector<8x1xf32>
    %147 = vector.broadcast %146 : vector<8x1xf32> to vector<8x32xf32>
    %148 = arith.mulf %143, %147 : vector<8x32xf32>
    %149 = vector.broadcast %4 : vector<1x32xf32> to vector<8x32xf32>
    %150 = arith.mulf %148, %149 : vector<8x32xf32>
    %151 = vector.broadcast %5 : vector<1x32xf32> to vector<8x32xf32>
    %152 = arith.addf %150, %151 : vector<8x32xf32>
    %153 = arith.truncf %152 : vector<8x32xf32> to vector<8x32xbf16>
    %c0_41 = arith.constant 0 : index
    %c0_42 = arith.constant 0 : index
    %154 = vector.load %arg5[%c0_41, %c0_42] : memref<32x32xbf16, #tpu.memory_space<vmem>>, vector<32x32xbf16>
    %cst_43 = arith.constant dense<0.000000e+00> : vector<8x32xf32>
    %155 = tpu.matmul %153, %154, %cst_43 {dimension_numbers = #tpu.dot_dimension_numbers<[1], [0], [0], [1], [0, 0, 1, 1], [], []>} : vector<8x32xbf16>, vector<32x32xbf16>, vector<8x32xf32> -> vector<8x32xf32>
    %156 = vector.broadcast %7 : vector<1x32xf32> to vector<8x32xf32>
    %157 = arith.addf %155, %156 : vector<8x32xf32>
    %cst_44 = arith.constant 0.000000e+00 : f32
    %158 = vector.broadcast %cst_44 : f32 to vector<8x32xf32>
    %159 = arith.maximumf %157, %158 : vector<8x32xf32>
    %160 = arith.truncf %159 : vector<8x32xf32> to vector<8x32xbf16>
    %c0_45 = arith.constant 0 : index
    %c0_46 = arith.constant 0 : index
    %161 = vector.load %arg6[%c0_45, %c0_46] : memref<32x32xbf16, #tpu.memory_space<vmem>>, vector<32x32xbf16>
    %cst_47 = arith.constant dense<0.000000e+00> : vector<8x32xf32>
    %162 = tpu.matmul %160, %161, %cst_47 {dimension_numbers = #tpu.dot_dimension_numbers<[1], [0], [0], [1], [0, 0, 1, 1], [], []>} : vector<8x32xbf16>, vector<32x32xbf16>, vector<8x32xf32> -> vector<8x32xf32>
    %163 = vector.broadcast %8 : vector<1x32xf32> to vector<8x32xf32>
    %164 = arith.addf %162, %163 : vector<8x32xf32>
    %165 = arith.addf %130, %164 : vector<8x32xf32>
    %c0_48 = arith.constant 0 : index
    %c0_49 = arith.constant 0 : index
    %166 = vector.load %arg7[%c0_48, %c0_49] : memref<8x32xf32, #tpu.memory_space<vmem>>, vector<8x32xf32>
    tpu.vector_store %arg7[%c0_48, %c0_49], %165 {strides = array<i32>} : memref<8x32xf32, #tpu.memory_space<vmem>>, vector<8x32xf32>,
    return
  }
  func.func @transform_0(%arg0: i32) -> (i32, i32) {
    %c0_i32 = arith.constant 0 : i32
    %c0_i32_0 = arith.constant 0 : i32
    return %arg0, %c0_i32 : i32, i32
  }
  func.func @transform_1(%arg0: i32) -> (i32, i32) {
    %c0_i32 = arith.constant 0 : i32
    %c0_i32_0 = arith.constant 0 : i32
    %c0_i32_1 = arith.constant 0 : i32
    return %c0_i32, %c0_i32_0 : i32, i32
  }
  func.func @transform_2(%arg0: i32) -> (i32, i32) {
    %c0_i32 = arith.constant 0 : i32
    %c0_i32_0 = arith.constant 0 : i32
    %c0_i32_1 = arith.constant 0 : i32
    return %c0_i32, %c0_i32_0 : i32, i32
  }
  func.func @transform_3(%arg0: i32) -> (i32, i32) {
    %c0_i32 = arith.constant 0 : i32
    %c0_i32_0 = arith.constant 0 : i32
    %c0_i32_1 = arith.constant 0 : i32
    return %c0_i32, %c0_i32_0 : i32, i32
  }
  func.func @transform_4(%arg0: i32) -> (i32, i32) {
    %c0_i32 = arith.constant 0 : i32
    %c0_i32_0 = arith.constant 0 : i32
    %c0_i32_1 = arith.constant 0 : i32
    return %c0_i32, %c0_i32_0 : i32, i32
  }
  func.func @transform_5(%arg0: i32) -> (i32, i32) {
    %c0_i32 = arith.constant 0 : i32
    %c0_i32_0 = arith.constant 0 : i32
    %c0_i32_1 = arith.constant 0 : i32
    return %c0_i32, %c0_i32_0 : i32, i32
  }
  func.func @transform_6(%arg0: i32) -> (i32, i32) {
    %c0_i32 = arith.constant 0 : i32
    %c0_i32_0 = arith.constant 0 : i32
    return %arg0, %c0_i32 : i32, i32
  }
}

</mosaic_0001>

<llo_original>
// kernel: tpu_custom_call.1
$region0: #{tpu_custom_call.1}
  #allocation0 [shape = 'u32[]', space=smem, size = 0x4, offset = 0x4, fixed_abs, tag = 'smem constant byte address 0x4 - core index']
  #allocation1 [shape = 'u32[144,128]{1,0:T(1,128)}', space=vmem, size = 0x12000, scoped, tag = 'internal scratch']
  #allocation2 [shape = 'f32[8,32]{1,0:T(8,128)}', space=vmem, size = 0x1000, scoped, tag = 'scratch operand']
  %s0 = inlined_call_operand.hbm [shape: f32[16,32], index: 0, kind: input, shape index: {}]
  %s1 = inlined_call_operand.hbm [shape: f32[10,32], index: 1, kind: input, shape index: {}]
  %s2 = inlined_call_operand.hbm [shape: bf16[32,96], index: 2, kind: input, shape index: {}]
  %s3 = inlined_call_operand.hbm [shape: bf16[32,32], index: 3, kind: input, shape index: {}]
  %s4 = inlined_call_operand.hbm [shape: bf16[32,32], index: 4, kind: input, shape index: {}]
  %s5 = inlined_call_operand.vmem [shape: bf16[32,32], index: 5, kind: input, shape index: {}]
  %s6 = inlined_call_operand.hbm [shape: f32[16,32], index: 6, kind: output, shape index: {}]
  %s7 = sld [smem:[#allocation0]]
  $region77: #{tpu_custom_call.1} parent=0
    _
  %s9 = ssub.s32 1, %s7
  %s10 = scalar_select 0, %s9, %s7
  $region1: #{tpu_custom_call.1} parent=0
    #allocation3 [shape = 'u8[8192]{0}', space=vmem, size = 0x2000, scoped, tag = 'input window, operand 0']
    #allocation4 [shape = 's32[2]{0}', space=sflag, size = 0x8, scoped, tag = 'scoped memory for tpu_custom_call.1']
    #allocation5 [shape = 's32[2]{0}', space=sflag, size = 0x8, scoped, tag = 'scoped memory for tpu_custom_call.1']
    #allocation6 [shape = 'u8[8192]{0}', space=vmem, size = 0x2000, scoped, tag = 'input window, operand 1, single buffered']
    #allocation7 [shape = 's32[1]{0}', space=sflag, size = 0x4, scoped, tag = 'scoped memory for tpu_custom_call.1']
    #allocation8 [shape = 'u8[8192]{0}', space=vmem, size = 0x2000, scoped, tag = 'input window, operand 2, single buffered']
    #allocation9 [shape = 'u8[8192]{0}', space=vmem, size = 0x2000, scoped, tag = 'input window, operand 3, single buffered']
    #allocation10 [shape = 's32[1]{0}', space=sflag, size = 0x4, scoped, tag = 'scoped memory for tpu_custom_call.1']
    #allocation11 [shape = 'u8[8192]{0}', space=vmem, size = 0x2000, scoped, tag = 'input window, operand 4, single buffered']
    #allocation12 [shape = 'u8[8192]{0}', space=vmem, size = 0x2000, scoped, tag = 'output window, operand 0']
    %11 = vsyncpa [#allocation4], 0
    %s12 = scalar_lea.sflag [#allocation4], 1
    %13 = vsyncpa %s12, 0
    %14 = vsyncpa [#allocation7], 0
    %15 = vsyncpa [#allocation10], 0
    %16 = vsyncpa [#allocation5], 0
    %s17 = scalar_lea.sflag [#allocation5], 1
    %18 = vsyncpa %s17, 0
    loop: start=0, step=1, limit=4
    $region2: #{tpu_custom_call.1} parent=1 // loop_pre_header
      _
    $region3: #{tpu_custom_call.1} parent=1 // loop_header
      %s20 = sphi 0, %s24
      %p21 = scmp.ge.s32.totalorder %s20, 4
      %s30 = sphi 0, %s32
      %s33 = sphi 0, %s30
      %s34 = sphi 0, %s33
      %s50 = sphi 0, %s34
      %s54 = sphi 0, %s54
      %s56 = sphi 0, %s54
      %s57 = sphi 0, %s56
      %s71 = sphi 0, %s57
      %s75 = sphi 0, %s75
      %s77 = sphi 0, %s75
      %s78 = sphi 0, %s77
      %s92 = sphi 0, %s78
      %s96 = sphi 0, %s96
      %s98 = sphi 0, %s96
      %s99 = sphi 0, %s98
      %s113 = sphi 0, %s99
      %s117 = sphi 0, %s117
      %s119 = sphi 0, %s117
      %s120 = sphi 0, %s119
      %s134 = sphi 0, %s120
      %s138 = sphi 0, %s138
      %s140 = sphi 0, %s138
      %s141 = sphi 0, %s140
      %s155 = sphi 0, %s141
      %s161 = sphi 0, %s163
      %s164 = sphi 0, %s161
      %s165 = sphi 0, %s164
      %s181 = sphi 0, %s165
    $region4: #{tpu_custom_call.1} parent=1 // loop_header_branch
      %23 = sbr.rel (%p21) target = $region8
    $region5: #{tpu_custom_call.1} parent=1 // loop_body
      %s25 = ssub.s32 %s20, 1
      %s26 = ssub.s32 %s20, 2
      %s27 = sadd.s32 %s20, 1
      %s28 = ssub.s32 %s20, %s27
      %p29 = scmp.eq.s32.totalorder %s28, 0
      %s31 = sadd.s32 %s30, 1
      %s32 = scalar_select %p29, %s30, %s31
      %p35 = pneg %p29
      %p36 = scmp.eq.s32.totalorder %s20, 1
      %p37 = por %p35, %p36
      %p38 = scmp.ne.s32.totalorder %s30, %s33
      %p39 = scmp.eq.s32.totalorder %s20, 0
      %p40 = por %p38, %p39
      %p41 = scmp.ne.s32.totalorder %s30, %s33
      %p42 = scmp.eq.s32.totalorder %s25, 1
      %p43 = por %p41, %p42
      %p44 = scmp.ne.s32.totalorder %s33, %s34
      %p45 = scmp.eq.s32.totalorder %s25, 0
      %p46 = por %p44, %p45
      %p47 = scmp.ne.s32.totalorder %s33, %s34
      %p48 = scmp.eq.s32.totalorder %s26, 1
      %p49 = por %p47, %p48
      %p51 = scmp.ne.s32.totalorder %s34, %s50
      %p52 = scmp.eq.s32.totalorder %s26, 0
      %p53 = por %p51, %p52
      %s55 = sadd.s32 %s54, 1
      %p58 = scmp.eq.s32.totalorder %s20, 1
      %p59 = scmp.ne.s32.totalorder %s54, %s56
      %p60 = scmp.eq.s32.totalorder %s20, 0
      %p61 = por %p59, %p60
      %p62 = scmp.ne.s32.totalorder %s54, %s56
      %p63 = scmp.eq.s32.totalorder %s25, 1
      %p64 = por %p62, %p63
      %p65 = scmp.ne.s32.totalorder %s56, %s57
      %p66 = scmp.eq.s32.totalorder %s25, 0
      %p67 = por %p65, %p66
      %p68 = scmp.ne.s32.totalorder %s56, %s57
      %p69 = scmp.eq.s32.totalorder %s26, 1
      %p70 = por %p68, %p69
      %p72 = scmp.ne.s32.totalorder %s57, %s71
      %p73 = scmp.eq.s32.totalorder %s26, 0
      %p74 = por %p72, %p73
      %s76 = sadd.s32 %s75, 1
      %p79 = scmp.eq.s32.totalorder %s20, 1
      %p80 = scmp.ne.s32.totalorder %s75, %s77
      %p81 = scmp.eq.s32.totalorder %s20, 0
      %p82 = por %p80, %p81
      %p83 = scmp.ne.s32.totalorder %s75, %s77
      %p84 = scmp.eq.s32.totalorder %s25, 1
      %p85 = por %p83, %p84
      %p86 = scmp.ne.s32.totalorder %s77, %s78
      %p87 = scmp.eq.s32.totalorder %s25, 0
      %p88 = por %p86, %p87
      %p89 = scmp.ne.s32.totalorder %s77, %s78
      %p90 = scmp.eq.s32.totalorder %s26, 1
      %p91 = por %p89, %p90
      %p93 = scmp.ne.s32.totalorder %s78, %s92
      %p94 = scmp.eq.s32.totalorder %s26, 0
      %p95 = por %p93, %p94
      %s97 = sadd.s32 %s96, 1
      %p100 = scmp.eq.s32.totalorder %s20, 1
      %p101 = scmp.ne.s32.totalorder %s96, %s98
      %p102 = scmp.eq.s32.totalorder %s20, 0
      %p103 = por %p101, %p102
      %p104 = scmp.ne.s32.totalorder %s96, %s98
      %p105 = scmp.eq.s32.totalorder %s25, 1
      %p106 = por %p104, %p105
      %p107 = scmp.ne.s32.totalorder %s98, %s99
      %p108 = scmp.eq.s32.totalorder %s25, 0
      %p109 = por %p107, %p108
      %p110 = scmp.ne.s32.totalorder %s98, %s99
      %p111 = scmp.eq.s32.totalorder %s26, 1
      %p112 = por %p110, %p111
      %p114 = scmp.ne.s32.totalorder %s99, %s113
      %p115 = scmp.eq.s32.totalorder %s26, 0
      %p116 = por %p114, %p115
      %s118 = sadd.s32 %s117, 1
      %p121 = scmp.eq.s32.totalorder %s20, 1
      %p122 = scmp.ne.s32.totalorder %s117, %s119
      %p123 = scmp.eq.s32.totalorder %s20, 0
      %p124 = por %p122, %p123
      %p125 = scmp.ne.s32.totalorder %s117, %s119
      %p126 = scmp.eq.s32.totalorder %s25, 1
      %p127 = por %p125, %p126
      %p128 = scmp.ne.s32.totalorder %s119, %s120
      %p129 = scmp.eq.s32.totalorder %s25, 0
      %p130 = por %p128, %p129
      %p131 = scmp.ne.s32.totalorder %s119, %s120
      %p132 = scmp.eq.s32.totalorder %s26, 1
      %p133 = por %p131, %p132
      %p135 = scmp.ne.s32.totalorder %s120, %s134
      %p136 = scmp.eq.s32.totalorder %s26, 0
      %p137 = por %p135, %p136
      %s139 = sadd.s32 %s138, 1
      %p142 = scmp.eq.s32.totalorder %s20, 1
      %p143 = scmp.ne.s32.totalorder %s138, %s140
      %p144 = scmp.eq.s32.totalorder %s20, 0
      %p145 = por %p143, %p144
      %p146 = scmp.ne.s32.totalorder %s138, %s140
      %p147 = scmp.eq.s32.totalorder %s25, 1
      %p148 = por %p146, %p147
      %p149 = scmp.ne.s32.totalorder %s140, %s141
      %p150 = scmp.eq.s32.totalorder %s25, 0
      %p151 = por %p149, %p150
      %p152 = scmp.ne.s32.totalorder %s140, %s141
      %p153 = scmp.eq.s32.totalorder %s26, 1
      %p154 = por %p152, %p153
      %p156 = scmp.ne.s32.totalorder %s141, %s155
      %p157 = scmp.eq.s32.totalorder %s26, 0
      %p158 = por %p156, %p157
      %s159 = ssub.s32 %s20, %s27
      %p160 = scmp.eq.s32.totalorder %s159, 0
      %s162 = sadd.s32 %s161, 1
      %s163 = scalar_select %p160, %s161, %s162
      %p166 = pneg %p160
      %p167 = scmp.eq.s32.totalorder %s20, 1
      %p168 = por %p166, %p167
      %p169 = scmp.ne.s32.totalorder %s161, %s164
      %p170 = scmp.eq.s32.totalorder %s20, 0
      %p171 = por %p169, %p170
      %p172 = scmp.ne.s32.totalorder %s161, %s164
      %p173 = scmp.eq.s32.totalorder %s25, 1
      %p174 = por %p172, %p173
      %p175 = scmp.ne.s32.totalorder %s164, %s165
      %p176 = scmp.eq.s32.totalorder %s25, 0
      %p177 = por %p175, %p176
      %p178 = scmp.ne.s32.totalorder %s164, %s165
      %p179 = scmp.eq.s32.totalorder %s26, 1
      %p180 = por %p178, %p179
      %p182 = scmp.ne.s32.totalorder %s165, %s181
      %p183 = scmp.eq.s32.totalorder %s26, 0
      %p184 = por %p182, %p183
      %p185 = scmp.le.s32.totalorder 1, %s20
      %p186 = scmp.lt.s32.totalorder %s20, 3
      %p187 = pnand %p185, %p186
      %p188 = pneg %p187
      // Predicated region
      $region9: #{tpu_custom_call.1} parent=5 // pred_check
        _
      $region10: #{tpu_custom_call.1} parent=5 // pred_check_branch
        %190 = sbr.rel (%p187) target = $region12
      $region11: #{tpu_custom_call.1} parent=5 // pred_region
        %s191 = ssub.s32 %s20, 1
        // Predicated region
        $region13: #{tpu_custom_call.1} parent=11 // pred_check
          %p192 = pneg %p67
        $region14: #{tpu_custom_call.1} parent=11 // pred_check_branch
          %194 = sbr.rel (%p192) target = $region16
        $region15: #{tpu_custom_call.1} parent=11 // pred_region
          %s196 = ssub.s32 256, 256
          %197 = vsyncadd [#allocation7], %s196
          %s198 = sshll.u32 [#allocation6], 4
          %s199 = int_to_ptr.vmem [resolvable:$true] %s198
          %204 = dma.hbm_to_vmem [thread:$0]  %s1, 256, %s199, [#allocation7], 128, 128, 8
        $region16: #{tpu_custom_call.1} parent=11 // pred_fallthru
          _
        // Predicated region
        $region17: #{tpu_custom_call.1} parent=11 // pred_check
          %p205 = pneg %p88
        $region18: #{tpu_custom_call.1} parent=11 // pred_check_branch
          %207 = sbr.rel (%p205) target = $region20
        $region19: #{tpu_custom_call.1} parent=11 // pred_region
          %s209 = ssub.s32 256, 256
          %210 = vsyncadd [#allocation7], %s209
          %s211 = sshll.u32 [#allocation8], 4
          %s212 = int_to_ptr.vmem [resolvable:$true] %s211
          %217 = dma.hbm_to_vmem [thread:$0]  %s2, 256, %s212, [#allocation7], 64, 64, 4
        $region20: #{tpu_custom_call.1} parent=11 // pred_fallthru
          _
        // Predicated region
        $region21: #{tpu_custom_call.1} parent=11 // pred_check
          %p218 = pneg %p109
        $region22: #{tpu_custom_call.1} parent=11 // pred_check_branch
          %220 = sbr.rel (%p218) target = $region24
        $region23: #{tpu_custom_call.1} parent=11 // pred_region
          %s222 = ssub.s32 256, 256
          %223 = vsyncadd [#allocation10], %s222
          %s224 = sshll.u32 [#allocation9], 4
          %s225 = int_to_ptr.vmem [resolvable:$true] %s224
          %230 = dma.hbm_to_vmem [thread:$0]  %s3, 256, %s225, [#allocation10], 64, 64, 4
        $region24: #{tpu_custom_call.1} parent=11 // pred_fallthru
          _
        // Predicated region
        $region25: #{tpu_custom_call.1} parent=11 // pred_check
          %p231 = pneg %p130
        $region26: #{tpu_custom_call.1} parent=11 // pred_check_branch
          %233 = sbr.rel (%p231) target = $region28
        $region27: #{tpu_custom_call.1} parent=11 // pred_region
          %s235 = ssub.s32 256, 256
          %236 = vsyncadd [#allocation10], %s235
          %s237 = sshll.u32 [#allocation11], 4
          %s238 = int_to_ptr.vmem [resolvable:$true] %s237
          %243 = dma.hbm_to_vmem [thread:$0]  %s4, 256, %s238, [#allocation10], 64, 64, 4
        $region28: #{tpu_custom_call.1} parent=11 // pred_fallthru
          _
        // Predicated region
        $region29: #{tpu_custom_call.1} parent=11 // pred_check
          %p244 = pneg %p151
        $region30: #{tpu_custom_call.1} parent=11 // pred_check_branch
          %246 = sbr.rel (%p244) target = $region32
        $region31: #{tpu_custom_call.1} parent=11 // pred_region
          _
        $region32: #{tpu_custom_call.1} parent=11 // pred_fallthru
          _
      $region12: #{tpu_custom_call.1} parent=5 // pred_fallthru
        _
      %p247 = scmp.lt.s32.totalorder %s20, 2
      // Predicated region
      $region33: #{tpu_custom_call.1} parent=5 // pred_check
        %p248 = pneg %p247
      $region34: #{tpu_custom_call.1} parent=5 // pred_check_branch
        %250 = sbr.rel (%p248) target = $region36
      $region35: #{tpu_custom_call.1} parent=5 // pred_region
        // Predicated region
        $region37: #{tpu_custom_call.1} parent=35 // pred_check
          %p251 = pneg %p40
        $region38: #{tpu_custom_call.1} parent=35 // pred_check_branch
          %253 = sbr.rel (%p251) target = $region40
        $region39: #{tpu_custom_call.1} parent=35 // pred_region
          %s254 = sand.u32 %s30, 1
          %s255 = scalar_lea.sflag [#allocation4], %s254
          %s256 = sand.u32 %s30, 1
          %s257 = smul.addr %s256, 8
          %s258 = scalar_lea.vmem [#allocation3], %s257
          %s260 = ssub.s32 128, 128
          %261 = vsyncadd %s255, %s260
          %s262 = smul.addr %s20, 128
          %s263 = scalar_lea.hbm %s0, %s262
          %s265 = sshll.u32 %s258, 4
          %s266 = int_to_ptr.vmem [resolvable:$true] %s265
          %268 = dma.hbm_to_vmem [thread:$0]  %s263, 128, %s266, %s255
        $region40: #{tpu_custom_call.1} parent=35 // pred_fallthru
          _
      $region36: #{tpu_custom_call.1} parent=5 // pred_fallthru
        _
      %p269 = scmp.le.s32.totalorder 1, %s20
      %p270 = scmp.lt.s32.totalorder %s20, 3
      %p271 = pnand %p269, %p270
      %p272 = pneg %p271
      // Predicated region
      $region41: #{tpu_custom_call.1} parent=5 // pred_check
        _
      $region42: #{tpu_custom_call.1} parent=5 // pred_check_branch
        %274 = sbr.rel (%p271) target = $region44
      $region43: #{tpu_custom_call.1} parent=5 // pred_region
        %s275 = ssub.s32 %s20, 1
        %s276 = sand.u32 %s33, 1
        %s277 = scalar_lea.sflag [#allocation4], %s276
        %s278 = sand.u32 %s33, 1
        %s279 = smul.addr %s278, 8
        %s280 = scalar_lea.vmem [#allocation3], %s279
        // Predicated region
        $region45: #{tpu_custom_call.1} parent=43 // pred_check
          %p281 = pneg %p46
        $region46: #{tpu_custom_call.1} parent=43 // pred_check_branch
          %283 = sbr.rel (%p281) target = $region48
        $region47: #{tpu_custom_call.1} parent=43 // pred_region
          %284 = dma.done %s277, 128
        $region48: #{tpu_custom_call.1} parent=43 // pred_fallthru
          _
        // Predicated region
        $region49: #{tpu_custom_call.1} parent=43 // pred_check
          %p285 = pneg %p67
        $region50: #{tpu_custom_call.1} parent=43 // pred_check_branch
          %287 = sbr.rel (%p285) target = $region52
        $region51: #{tpu_custom_call.1} parent=43 // pred_region
          %288 = dma.done [#allocation7], 256
        $region52: #{tpu_custom_call.1} parent=43 // pred_fallthru
          _
        // Predicated region
        $region53: #{tpu_custom_call.1} parent=43 // pred_check
          %p289 = pneg %p88
        $region54: #{tpu_custom_call.1} parent=43 // pred_check_branch
          %291 = sbr.rel (%p289) target = $region56
        $region55: #{tpu_custom_call.1} parent=43 // pred_region
          %292 = dma.done [#allocation7], 256
        $region56: #{tpu_custom_call.1} parent=43 // pred_fallthru
          _
        // Predicated region
        $region57: #{tpu_custom_call.1} parent=43 // pred_check
          %p293 = pneg %p109
        $region58: #{tpu_custom_call.1} parent=43 // pred_check_branch
          %295 = sbr.rel (%p293) target = $region60
        $region59: #{tpu_custom_call.1} parent=43 // pred_region
          %296 = dma.done [#allocation10], 256
        $region60: #{tpu_custom_call.1} parent=43 // pred_fallthru
          _
        // Predicated region
        $region61: #{tpu_custom_call.1} parent=43 // pred_check
          %p297 = pneg %p130
        $region62: #{tpu_custom_call.1} parent=43 // pred_check_branch
          %299 = sbr.rel (%p297) target = $region64
        $region63: #{tpu_custom_call.1} parent=43 // pred_region
          %300 = dma.done [#allocation10], 256
        $region64: #{tpu_custom_call.1} parent=43 // pred_fallthru
          _
        %s301 = sand.u32 %s33, 1
        %s302 = scalar_lea.sflag [#allocation4], %s301
        %s303 = sand.u32 %s33, 1
        %s304 = smul.addr %s303, 8
        %s305 = scalar_lea.vmem [#allocation3], %s304
        %p306 = pneg %p46
        %p307 = pneg %p43
        %p308 = pneg %p67
        %p309 = pneg %p64
        %p310 = pneg %p88
        %p311 = pneg %p85
        %p312 = pneg %p109
        %p313 = pneg %p106
        %p314 = pneg %p130
        %p315 = pneg %p127
        %p316 = pneg %p151
        %p317 = pneg %p148
        %p318 = pneg %p177
        %p319 = pneg %p174
        %s320 = sand.u32 %s164, 1
        %s321 = scalar_lea.sflag [#allocation5], %s320
        %s322 = sand.u32 %s164, 1
        %s323 = smul.addr %s322, 8
        %s324 = scalar_lea.vmem [#allocation12], %s323
        %v326 = vld [vmem:[%s280] sm:$0xff]
        %v327 = vld [vmem:[#allocation6] sm:$0xff]
        %v328 = vld [vmem:[#allocation6 + $0x8] sm:$0x3]
        %vm329 = vcmask 261120
        %v330 = vsel %vm329, %v326, 0.0
        %331 = vadd.xlane.f32.xlu0 %v330
        %v332 = vpop.xlane.xlu0 %331
        %v333 = vrcp.pop 32.0
        %v334 = vmul.f32 %v332, %v333
        %v335 = vsub.f32 %v326, %v334
        %v336 = vmul.f32 %v335, %v335
        %v337 = vsel %vm329, %v336, 0.0
        %338 = vadd.xlane.f32.xlu0 %v337
        %v339 = vpop.xlane.xlu0 %338
        %v340 = vmul.f32 %v339, %v333
        %v341 = vadd.f32 %v340, 1e-05
        %v342 = vrsqrt.pop %v341
        %v343 = vmul.f32 %v335, %v342
        %v344 = vlaneseq
        %v345 = vshrl.u32 %v344, 7
        %v346 = vsub.s32 0, %v345
        %v347 = vrot.slane %v327, %v346
        %v348 = vmul.f32 %v343, %v347
        %v349 = vlaneseq
        %v350 = vshrl.u32 %v349, 7
        %v351 = vsub.s32 1, %v350
        %v352 = vrot.slane %v327, %v351
        %v353 = vadd.f32 %v348, %v352
        %v354 = vpack.c.bf16 %v353, %v353
        %v355 = vld [vmem:[#allocation8] sm:$0xf]
        %v356 = vld [vmem:[#allocation8 + $0x4] sm:$0xf]
        %v357 = vld [vmem:[#allocation8 + $0x8] sm:$0xf]
        %v358 = vld [vmem:[#allocation8 + $0xc] sm:$0xf]
        %v363 = vunpack.c.l.b16 %v355
        %v364 = vunpack.c.l.b16 %v356
        %v365 = vunpack.c.l.b16 %v357
        %v366 = vunpack.c.l.b16 %v358
        %v367 = vpack.c.b16 %v364, %v363
        %v368 = vpack.c.b16 %v366, %v365
        %v372 = vsel %vm329, %v354, 0
        %374 = vmatprep.subr.bf16.mxu0 0
        %375 = vmatpush1.bf16.msra.mxu0 %v367
        %376 = vmatprep.subr.bf16.mxu0 0
        %377 = vmatpush1.bf16.msra.mxu0 %v368
        %378 = vmatprep.subr.bf16.mxu0 0
        %379 = vmatpush1.bf16.msra.mxu0 0
        %380 = vmatprep.subr.bf16.mxu0 0
        %381 = vmatpush1.bf16.msra.mxu0 0
        %382 = vmatprep.subr.bf16.mxu0 0
        %383 = vmatpush1.bf16.msra.mxu0 0
        %384 = vmatprep.subr.bf16.mxu0 0
        %385 = vmatpush1.bf16.msra.mxu0 0
        %386 = vmatprep.subr.bf16.mxu0 0
        %387 = vmatpush1.bf16.msra.mxu0 0
        %388 = vmatprep.subr.bf16.mxu0 0
        %389 = vmatpush1.bf16.msra.mxu0 0
        %390 = vmatprep.subr.bf16.mxu0 0
        %391 = vmatpush1.bf16.msra.mxu0 0
        %392 = vmatprep.subr.bf16.mxu0 0
        %393 = vmatpush1.bf16.msra.mxu0 0
        %394 = vmatprep.subr.bf16.mxu0 0
        %395 = vmatpush1.bf16.msra.mxu0 0
        %396 = vmatprep.subr.bf16.mxu0 0
        %397 = vmatpush1.bf16.msra.mxu0 0
        %398 = vmatprep.subr.bf16.mxu0 0
        %399 = vmatpush1.bf16.msra.mxu0 0
        %400 = vmatprep.subr.bf16.mxu0 0
        %401 = vmatpush1.bf16.msra.mxu0 0
        %402 = vmatprep.subr.bf16.mxu0 0
        %403 = vmatpush1.bf16.msra.mxu0 0
        %404 = vmatprep.subr.bf16.mxu0 0
        %405 = vmatpush1.bf16.msra.mxu0 0
        %406 = vmatprep.mubr.bf16.mxu0 0
        %407 = vmatmul.mubr.bf16.gmra.mrb[0].mxu0 %v372
        %v408 = vpop.f32.mrb[0].mxu0
        %v409 = vadd.f32 0.0, %v408
        %v410 = vpop.f32.mrb[0].mxu0
        %v411 = vpop.f32.mrb[0].mxu0
        %v412 = vpop.f32.mrb[0].mxu0
        %413 = vdwg.mxu0
        %v414 = vlaneseq
        %v415 = vshrl.u32 %v414, 7
        %v416 = vsub.s32 7, %v415
        %v417 = vrot.slane %v327, %v416
        %v418 = vadd.f32 %v409, %v417
        %v419 = vpack.c.bf16 %v418, %v418
        %v420 = vlaneseq
        %v421 = vshrl.u32 %v420, 7
        %v422 = vsub.s32 0, %v421
        %v423 = vrot.slane %v328, %v422
        %425 = vrot.lane.b32.xlu0 %v423, 32
        %v426 = vpop.permute.xlu0 %425
        %v428 = vadd.f32 %v409, %v426
        %v429 = vpack.c.bf16 %v428, %v428
        %v430 = vlaneseq
        %v431 = vshrl.u32 %v430, 7
        %v432 = vsub.s32 1, %v431
        %v433 = vrot.slane %v328, %v432
        %435 = vrot.lane.b32.xlu0 %v433, 64
        %v436 = vpop.permute.xlu0 %435
        %v438 = vadd.f32 %v409, %v436
        %v439 = vpack.c.bf16 %v438, %v438
        %441 = vrot.lane.b32.xlu0 %v429, 96
        %v442 = vpop.permute.xlu0 %441
        %vm443 = vcmask 64512
        %v445 = vsel %vm443, %v419, 0
        %v448 = vsel %vm443, %v442, 0
        %450 = vmatprep.subr.bf16.mxu0 0
        %451 = vmatpush1.bf16.xpose.msra.mxu0 %v448
        %452 = vmatprep.subr.bf16.mxu0 0
        %453 = vmatpush1.bf16.xpose.msra.mxu0 0
        %454 = vmatprep.subr.bf16.mxu0 0
        %455 = vmatpush1.bf16.xpose.msra.mxu0 0
        %456 = vmatprep.subr.bf16.mxu0 0
        %457 = vmatpush1.bf16.xpose.msra.mxu0 0
        %458 = vmatprep.subr.bf16.mxu0 0
        %459 = vmatpush1.bf16.xpose.msra.mxu0 0
        %460 = vmatprep.subr.bf16.mxu0 0
        %461 = vmatpush1.bf16.xpose.msra.mxu0 0
        %462 = vmatprep.subr.bf16.mxu0 0
        %463 = vmatpush1.bf16.xpose.msra.mxu0 0
        %464 = vmatprep.subr.bf16.mxu0 0
        %465 = vmatpush1.bf16.xpose.msra.mxu0 0
        %466 = vmatprep.subr.bf16.mxu0 0
        %467 = vmatpush1.bf16.xpose.msra.mxu0 0
        %468 = vmatprep.subr.bf16.mxu0 0
        %469 = vmatpush1.bf16.xpose.msra.mxu0 0
        %470 = vmatprep.subr.bf16.mxu0 0
        %471 = vmatpush1.bf16.xpose.msra.mxu0 0
        %472 = vmatprep.subr.bf16.mxu0 0
        %473 = vmatpush1.bf16.xpose.msra.mxu0 0
        %474 = vmatprep.subr.bf16.mxu0 0
        %475 = vmatpush1.bf16.xpose.msra.mxu0 0
        %476 = vmatprep.subr.bf16.mxu0 0
        %477 = vmatpush1.bf16.xpose.msra.mxu0 0
        %478 = vmatprep.subr.bf16.mxu0 0
        %479 = vmatpush1.bf16.xpose.msra.mxu0 0
        %480 = vmatprep.subr.bf16.mxu0 0
        %481 = vmatpush1.bf16.xpose.msra.mxu0 0
        %482 = vmatprep.mubr.bf16.mxu0 0
        %483 = vmatmul.mubr.bf16.gmra.mrb[0].mxu0 %v445
        %v484 = vpop.f32.mrb[0].mxu0
        %v485 = vadd.f32 0.0, %v484
        %v486 = vpop.f32.mrb[0].mxu0
        %v487 = vpop.f32.mrb[0].mxu0
        %v488 = vpop.f32.mrb[0].mxu0
        %489 = vdwg.mxu0
        %v490 = vsel %vm443, %v485, -inf
        %491 = vmax.xlane.f32.xlu0 %v490
        %v492 = vpop.xlane.xlu0 %491
        %v493 = vsub.f32 %v485, %v492
        %v494 = vmul.f32 %v493, 1.442695
        %v495 = vpow.pop %v494
        %v496 = vsel %vm443, %v495, 0.0
        %497 = vadd.xlane.f32.xlu0 %v496
        %v498 = vpop.xlane.xlu0 %497
        %v499 = vrcp.pop %v498
        %v500 = vmul.f32 %v495, %v499
        %v501 = vpack.c.bf16 %v500, %v500
        %503 = vrot.lane.b32.xlu0 %v439, 64
        %v504 = vpop.permute.xlu0 %503
        %v506 = vsel %vm443, %v501, 0
        %vm508 = vcmask 1043456
        %v510 = vsel %vm508, %v504, 0
        %512 = vmatprep.subr.bf16.mxu0 0
        %513 = vmatpush1.bf16.msra.mxu0 %v510
        %514 = vmatprep.subr.bf16.mxu0 0
        %515 = vmatpush1.bf16.msra.mxu0 0
        %516 = vmatprep.subr.bf16.mxu0 0
        %517 = vmatpush1.bf16.msra.mxu0 0
        %518 = vmatprep.subr.bf16.mxu0 0
        %519 = vmatpush1.bf16.msra.mxu0 0
        %520 = vmatprep.subr.bf16.mxu0 0
        %521 = vmatpush1.bf16.msra.mxu0 0
        %522 = vmatprep.subr.bf16.mxu0 0
        %523 = vmatpush1.bf16.msra.mxu0 0
        %524 = vmatprep.subr.bf16.mxu0 0
        %525 = vmatpush1.bf16.msra.mxu0 0
        %526 = vmatprep.subr.bf16.mxu0 0
        %527 = vmatpush1.bf16.msra.mxu0 0
        %528 = vmatprep.subr.bf16.mxu0 0
        %529 = vmatpush1.bf16.msra.mxu0 0
        %530 = vmatprep.subr.bf16.mxu0 0
        %531 = vmatpush1.bf16.msra.mxu0 0
        %532 = vmatprep.subr.bf16.mxu0 0
        %533 = vmatpush1.bf16.msra.mxu0 0
        %534 = vmatprep.subr.bf16.mxu0 0
        %535 = vmatpush1.bf16.msra.mxu0 0
        %536 = vmatprep.subr.bf16.mxu0 0
        %537 = vmatpush1.bf16.msra.mxu0 0
        %538 = vmatprep.subr.bf16.mxu0 0
        %539 = vmatpush1.bf16.msra.mxu0 0
        %540 = vmatprep.subr.bf16.mxu0 0
        %541 = vmatpush1.bf16.msra.mxu0 0
        %542 = vmatprep.subr.bf16.mxu0 0
        %543 = vmatpush1.bf16.msra.mxu0 0
        %544 = vmatprep.mubr.bf16.mxu0 0
        %545 = vmatmul.mubr.bf16.gmra.mrb[0].mxu0 %v506
        %v546 = vpop.f32.mrb[0].mxu0
        %v547 = vadd.f32 0.0, %v546
        %v548 = vpop.f32.mrb[0].mxu0
        %v549 = vpop.f32.mrb[0].mxu0
        %v550 = vpop.f32.mrb[0].mxu0
        %551 = vdwg.mxu0
        %552 = vst.msk [vmem:[#allocation2] sm:$0xff] %vm443, %v547
        %554 = vrot.lane.b32.xlu0 %v419, 120
        %v555 = vpop.permute.xlu0 %554
        %556 = vrot.lane.b32.xlu0 %v429, 88
        %v557 = vpop.permute.xlu0 %556
        %v559 = vsel %vm443, %v555, 0
        %v562 = vsel %vm443, %v557, 0
        %564 = vmatprep.subr.bf16.mxu0 0
        %565 = vmatpush1.bf16.xpose.msra.mxu0 %v562
        %566 = vmatprep.subr.bf16.mxu0 0
        %567 = vmatpush1.bf16.xpose.msra.mxu0 0
        %568 = vmatprep.subr.bf16.mxu0 0
        %569 = vmatpush1.bf16.xpose.msra.mxu0 0
        %570 = vmatprep.subr.bf16.mxu0 0
        %571 = vmatpush1.bf16.xpose.msra.mxu0 0
        %572 = vmatprep.subr.bf16.mxu0 0
        %573 = vmatpush1.bf16.xpose.msra.mxu0 0
        %574 = vmatprep.subr.bf16.mxu0 0
        %575 = vmatpush1.bf16.xpose.msra.mxu0 0
        %576 = vmatprep.subr.bf16.mxu0 0
        %577 = vmatpush1.bf16.xpose.msra.mxu0 0
        %578 = vmatprep.subr.bf16.mxu0 0
        %579 = vmatpush1.bf16.xpose.msra.mxu0 0
        %580 = vmatprep.subr.bf16.mxu0 0
        %581 = vmatpush1.bf16.xpose.msra.mxu0 0
        %582 = vmatprep.subr.bf16.mxu0 0
        %583 = vmatpush1.bf16.xpose.msra.mxu0 0
        %584 = vmatprep.subr.bf16.mxu0 0
        %585 = vmatpush1.bf16.xpose.msra.mxu0 0
        %586 = vmatprep.subr.bf16.mxu0 0
        %587 = vmatpush1.bf16.xpose.msra.mxu0 0
        %588 = vmatprep.subr.bf16.mxu0 0
        %589 = vmatpush1.bf16.xpose.msra.mxu0 0
        %590 = vmatprep.subr.bf16.mxu0 0
        %591 = vmatpush1.bf16.xpose.msra.mxu0 0
        %592 = vmatprep.subr.bf16.mxu0 0
        %593 = vmatpush1.bf16.xpose.msra.mxu0 0
        %594 = vmatprep.subr.bf16.mxu0 0
        %595 = vmatpush1.bf16.xpose.msra.mxu0 0
        %596 = vmatprep.mubr.bf16.mxu0 0
        %597 = vmatmul.mubr.bf16.gmra.mrb[0].mxu0 %v559
        %v598 = vpop.f32.mrb[0].mxu0
        %v599 = vadd.f32 0.0, %v598
        %v600 = vpop.f32.mrb[0].mxu0
        %v601 = vpop.f32.mrb[0].mxu0
        %v602 = vpop.f32.mrb[0].mxu0
        %603 = vdwg.mxu0
        %v604 = vsel %vm443, %v599, -inf
        %605 = vmax.xlane.f32.xlu0 %v604
        %v606 = vpop.xlane.xlu0 %605
        %v607 = vsub.f32 %v599, %v606
        %v608 = vmul.f32 %v607, 1.442695
        %v609 = vpow.pop %v608
        %v610 = vsel %vm443, %v609, 0.0
        %611 = vadd.xlane.f32.xlu0 %v610
        %v612 = vpop.xlane.xlu0 %611
        %v613 = vrcp.pop %v612
        %v614 = vmul.f32 %v609, %v613
        %v615 = vpack.c.bf16 %v614, %v614
        %616 = vrot.lane.b32.xlu0 %v439, 56
        %v617 = vpop.permute.xlu0 %616
        %v619 = vsel %vm443, %v615, 0
        %v622 = vsel %vm508, %v617, 0
        %624 = vmatprep.subr.bf16.mxu0 0
        %625 = vmatpush1.bf16.msra.mxu0 %v622
        %626 = vmatprep.subr.bf16.mxu0 0
        %627 = vmatpush1.bf16.msra.mxu0 0
        %628 = vmatprep.subr.bf16.mxu0 0
        %629 = vmatpush1.bf16.msra.mxu0 0
        %630 = vmatprep.subr.bf16.mxu0 0
        %631 = vmatpush1.bf16.msra.mxu0 0
        %632 = vmatprep.subr.bf16.mxu0 0
        %633 = vmatpush1.bf16.msra.mxu0 0
        %634 = vmatprep.subr.bf16.mxu0 0
        %635 = vmatpush1.bf16.msra.mxu0 0
        %636 = vmatprep.subr.bf16.mxu0 0
        %637 = vmatpush1.bf16.msra.mxu0 0
        %638 = vmatprep.subr.bf16.mxu0 0
        %639 = vmatpush1.bf16.msra.mxu0 0
        %640 = vmatprep.subr.bf16.mxu0 0
        %641 = vmatpush1.bf16.msra.mxu0 0
        %642 = vmatprep.subr.bf16.mxu0 0
        %643 = vmatpush1.bf16.msra.mxu0 0
        %644 = vmatprep.subr.bf16.mxu0 0
        %645 = vmatpush1.bf16.msra.mxu0 0
        %646 = vmatprep.subr.bf16.mxu0 0
        %647 = vmatpush1.bf16.msra.mxu0 0
        %648 = vmatprep.subr.bf16.mxu0 0
        %649 = vmatpush1.bf16.msra.mxu0 0
        %650 = vmatprep.subr.bf16.mxu0 0
        %651 = vmatpush1.bf16.msra.mxu0 0
        %652 = vmatprep.subr.bf16.mxu0 0
        %653 = vmatpush1.bf16.msra.mxu0 0
        %654 = vmatprep.subr.bf16.mxu0 0
        %655 = vmatpush1.bf16.msra.mxu0 0
        %656 = vmatprep.mubr.bf16.mxu0 0
        %657 = vmatmul.mubr.bf16.gmra.mrb[0].mxu0 %v619
        %v658 = vpop.f32.mrb[0].mxu0
        %v659 = vadd.f32 0.0, %v658
        %v660 = vpop.f32.mrb[0].mxu0
        %v661 = vpop.f32.mrb[0].mxu0
        %v662 = vpop.f32.mrb[0].mxu0
        %663 = vdwg.mxu0
        %665 = vrot.lane.b32.xlu0 %v659, 8
        %v666 = vpop.permute.xlu0 %665
        %vm668 = vcmask 130112
        %669 = vst.msk [vmem:[#allocation2] sm:$0xff] %vm668, %v666
        %670 = vrot.lane.b32.xlu0 %v419, 112
        %v671 = vpop.permute.xlu0 %670
        %672 = vrot.lane.b32.xlu0 %v429, 80
        %v673 = vpop.permute.xlu0 %672
        %v675 = vsel %vm443, %v671, 0
        %v678 = vsel %vm443, %v673, 0
        %680 = vmatprep.subr.bf16.mxu0 0
        %681 = vmatpush1.bf16.xpose.msra.mxu0 %v678
        %682 = vmatprep.subr.bf16.mxu0 0
        %683 = vmatpush1.bf16.xpose.msra.mxu0 0
        %684 = vmatprep.subr.bf16.mxu0 0
        %685 = vmatpush1.bf16.xpose.msra.mxu0 0
        %686 = vmatprep.subr.bf16.mxu0 0
        %687 = vmatpush1.bf16.xpose.msra.mxu0 0
        %688 = vmatprep.subr.bf16.mxu0 0
        %689 = vmatpush1.bf16.xpose.msra.mxu0 0
        %690 = vmatprep.subr.bf16.mxu0 0
        %691 = vmatpush1.bf16.xpose.msra.mxu0 0
        %692 = vmatprep.subr.bf16.mxu0 0
        %693 = vmatpush1.bf16.xpose.msra.mxu0 0
        %694 = vmatprep.subr.bf16.mxu0 0
        %695 = vmatpush1.bf16.xpose.msra.mxu0 0
        %696 = vmatprep.subr.bf16.mxu0 0
        %697 = vmatpush1.bf16.xpose.msra.mxu0 0
        %698 = vmatprep.subr.bf16.mxu0 0
        %699 = vmatpush1.bf16.xpose.msra.mxu0 0
        %700 = vmatprep.subr.bf16.mxu0 0
        %701 = vmatpush1.bf16.xpose.msra.mxu0 0
        %702 = vmatprep.subr.bf16.mxu0 0
        %703 = vmatpush1.bf16.xpose.msra.mxu0 0
        %704 = vmatprep.subr.bf16.mxu0 0
        %705 = vmatpush1.bf16.xpose.msra.mxu0 0
        %706 = vmatprep.subr.bf16.mxu0 0
        %707 = vmatpush1.bf16.xpose.msra.mxu0 0
        %708 = vmatprep.subr.bf16.mxu0 0
        %709 = vmatpush1.bf16.xpose.msra.mxu0 0
        %710 = vmatprep.subr.bf16.mxu0 0
        %711 = vmatpush1.bf16.xpose.msra.mxu0 0
        %712 = vmatprep.mubr.bf16.mxu0 0
        %713 = vmatmul.mubr.bf16.gmra.mrb[0].mxu0 %v675
        %v714 = vpop.f32.mrb[0].mxu0
        %v715 = vadd.f32 0.0, %v714
        %v716 = vpop.f32.mrb[0].mxu0
        %v717 = vpop.f32.mrb[0].mxu0
        %v718 = vpop.f32.mrb[0].mxu0
        %719 = vdwg.mxu0
        %v720 = vsel %vm443, %v715, -inf
        %721 = vmax.xlane.f32.xlu0 %v720
        %v722 = vpop.xlane.xlu0 %721
        %v723 = vsub.f32 %v715, %v722
        %v724 = vmul.f32 %v723, 1.442695
        %v725 = vpow.pop %v724
        %v726 = vsel %vm443, %v725, 0.0
        %727 = vadd.xlane.f32.xlu0 %v726
        %v728 = vpop.xlane.xlu0 %727
        %v729 = vrcp.pop %v728
        %v730 = vmul.f32 %v725, %v729
        %v731 = vpack.c.bf16 %v730, %v730
        %732 = vrot.lane.b32.xlu0 %v439, 48
        %v733 = vpop.permute.xlu0 %732
        %v735 = vsel %vm443, %v731, 0
        %v738 = vsel %vm508, %v733, 0
        %740 = vmatprep.subr.bf16.mxu0 0
        %741 = vmatpush1.bf16.msra.mxu0 %v738
        %742 = vmatprep.subr.bf16.mxu0 0
        %743 = vmatpush1.bf16.msra.mxu0 0
        %744 = vmatprep.subr.bf16.mxu0 0
        %745 = vmatpush1.bf16.msra.mxu0 0
        %746 = vmatprep.subr.bf16.mxu0 0
        %747 = vmatpush1.bf16.msra.mxu0 0
        %748 = vmatprep.subr.bf16.mxu0 0
        %749 = vmatpush1.bf16.msra.mxu0 0
        %750 = vmatprep.subr.bf16.mxu0 0
        %751 = vmatpush1.bf16.msra.mxu0 0
        %752 = vmatprep.subr.bf16.mxu0 0
        %753 = vmatpush1.bf16.msra.mxu0 0
        %754 = vmatprep.subr.bf16.mxu0 0
        %755 = vmatpush1.bf16.msra.mxu0 0
        %756 = vmatprep.subr.bf16.mxu0 0
        %757 = vmatpush1.bf16.msra.mxu0 0
        %758 = vmatprep.subr.bf16.mxu0 0
        %759 = vmatpush1.bf16.msra.mxu0 0
        %760 = vmatprep.subr.bf16.mxu0 0
        %761 = vmatpush1.bf16.msra.mxu0 0
        %762 = vmatprep.subr.bf16.mxu0 0
        %763 = vmatpush1.bf16.msra.mxu0 0
        %764 = vmatprep.subr.bf16.mxu0 0
        %765 = vmatpush1.bf16.msra.mxu0 0
        %766 = vmatprep.subr.bf16.mxu0 0
        %767 = vmatpush1.bf16.msra.mxu0 0
        %768 = vmatprep.subr.bf16.mxu0 0
        %769 = vmatpush1.bf16.msra.mxu0 0
        %770 = vmatprep.subr.bf16.mxu0 0
        %771 = vmatpush1.bf16.msra.mxu0 0
        %772 = vmatprep.mubr.bf16.mxu0 0
        %773 = vmatmul.mubr.bf16.gmra.mrb[0].mxu0 %v735
        %v774 = vpop.f32.mrb[0].mxu0
        %v775 = vadd.f32 0.0, %v774
        %v776 = vpop.f32.mrb[0].mxu0
        %v777 = vpop.f32.mrb[0].mxu0
        %v778 = vpop.f32.mrb[0].mxu0
        %779 = vdwg.mxu0
        %781 = vrot.lane.b32.xlu0 %v775, 16
        %v782 = vpop.permute.xlu0 %781
        %vm784 = vcmask 195712
        %785 = vst.msk [vmem:[#allocation2] sm:$0xff] %vm784, %v782
        %786 = vrot.lane.b32.xlu0 %v419, 104
        %v787 = vpop.permute.xlu0 %786
        %788 = vrot.lane.b32.xlu0 %v429, 72
        %v789 = vpop.permute.xlu0 %788
        %v791 = vsel %vm443, %v787, 0
        %v794 = vsel %vm443, %v789, 0
        %796 = vmatprep.subr.bf16.mxu0 0
        %797 = vmatpush1.bf16.xpose.msra.mxu0 %v794
        %798 = vmatprep.subr.bf16.mxu0 0
        %799 = vmatpush1.bf16.xpose.msra.mxu0 0
        %800 = vmatprep.subr.bf16.mxu0 0
        %801 = vmatpush1.bf16.xpose.msra.mxu0 0
        %802 = vmatprep.subr.bf16.mxu0 0
        %803 = vmatpush1.bf16.xpose.msra.mxu0 0
        %804 = vmatprep.subr.bf16.mxu0 0
        %805 = vmatpush1.bf16.xpose.msra.mxu0 0
        %806 = vmatprep.subr.bf16.mxu0 0
        %807 = vmatpush1.bf16.xpose.msra.mxu0 0
        %808 = vmatprep.subr.bf16.mxu0 0
        %809 = vmatpush1.bf16.xpose.msra.mxu0 0
        %810 = vmatprep.subr.bf16.mxu0 0
        %811 = vmatpush1.bf16.xpose.msra.mxu0 0
        %812 = vmatprep.subr.bf16.mxu0 0
        %813 = vmatpush1.bf16.xpose.msra.mxu0 0
        %814 = vmatprep.subr.bf16.mxu0 0
        %815 = vmatpush1.bf16.xpose.msra.mxu0 0
        %816 = vmatprep.subr.bf16.mxu0 0
        %817 = vmatpush1.bf16.xpose.msra.mxu0 0
        %818 = vmatprep.subr.bf16.mxu0 0
        %819 = vmatpush1.bf16.xpose.msra.mxu0 0
        %820 = vmatprep.subr.bf16.mxu0 0
        %821 = vmatpush1.bf16.xpose.msra.mxu0 0
        %822 = vmatprep.subr.bf16.mxu0 0
        %823 = vmatpush1.bf16.xpose.msra.mxu0 0
        %824 = vmatprep.subr.bf16.mxu0 0
        %825 = vmatpush1.bf16.xpose.msra.mxu0 0
        %826 = vmatprep.subr.bf16.mxu0 0
        %827 = vmatpush1.bf16.xpose.msra.mxu0 0
        %828 = vmatprep.mubr.bf16.mxu0 0
        %829 = vmatmul.mubr.bf16.gmra.mrb[0].mxu0 %v791
        %v830 = vpop.f32.mrb[0].mxu0
        %v831 = vadd.f32 0.0, %v830
        %v832 = vpop.f32.mrb[0].mxu0
        %v833 = vpop.f32.mrb[0].mxu0
        %v834 = vpop.f32.mrb[0].mxu0
        %835 = vdwg.mxu0
        %v836 = vsel %vm443, %v831, -inf
        %837 = vmax.xlane.f32.xlu0 %v836
        %v838 = vpop.xlane.xlu0 %837
        %v839 = vsub.f32 %v831, %v838
        %v840 = vmul.f32 %v839, 1.442695
        %v841 = vpow.pop %v840
        %v842 = vsel %vm443, %v841, 0.0
        %843 = vadd.xlane.f32.xlu0 %v842
        %v844 = vpop.xlane.xlu0 %843
        %v845 = vrcp.pop %v844
        %v846 = vmul.f32 %v841, %v845
        %v847 = vpack.c.bf16 %v846, %v846
        %848 = vrot.lane.b32.xlu0 %v439, 40
        %v849 = vpop.permute.xlu0 %848
        %v851 = vsel %vm443, %v847, 0
        %v854 = vsel %vm508, %v849, 0
        %856 = vmatprep.subr.bf16.mxu0 0
        %857 = vmatpush1.bf16.msra.mxu0 %v854
        %858 = vmatprep.subr.bf16.mxu0 0
        %859 = vmatpush1.bf16.msra.mxu0 0
        %860 = vmatprep.subr.bf16.mxu0 0
        %861 = vmatpush1.bf16.msra.mxu0 0
        %862 = vmatprep.subr.bf16.mxu0 0
        %863 = vmatpush1.bf16.msra.mxu0 0
        %864 = vmatprep.subr.bf16.mxu0 0
        %865 = vmatpush1.bf16.msra.mxu0 0
        %866 = vmatprep.subr.bf16.mxu0 0
        %867 = vmatpush1.bf16.msra.mxu0 0
        %868 = vmatprep.subr.bf16.mxu0 0
        %869 = vmatpush1.bf16.msra.mxu0 0
        %870 = vmatprep.subr.bf16.mxu0 0
        %871 = vmatpush1.bf16.msra.mxu0 0
        %872 = vmatprep.subr.bf16.mxu0 0
        %873 = vmatpush1.bf16.msra.mxu0 0
        %874 = vmatprep.subr.bf16.mxu0 0
        %875 = vmatpush1.bf16.msra.mxu0 0
        %876 = vmatprep.subr.bf16.mxu0 0
        %877 = vmatpush1.bf16.msra.mxu0 0
        %878 = vmatprep.subr.bf16.mxu0 0
        %879 = vmatpush1.bf16.msra.mxu0 0
        %880 = vmatprep.subr.bf16.mxu0 0
        %881 = vmatpush1.bf16.msra.mxu0 0
        %882 = vmatprep.subr.bf16.mxu0 0
        %883 = vmatpush1.bf16.msra.mxu0 0
        %884 = vmatprep.subr.bf16.mxu0 0
        %885 = vmatpush1.bf16.msra.mxu0 0
        %886 = vmatprep.subr.bf16.mxu0 0
        %887 = vmatpush1.bf16.msra.mxu0 0
        %888 = vmatprep.mubr.bf16.mxu0 0
        %889 = vmatmul.mubr.bf16.gmra.mrb[0].mxu0 %v851
        %v890 = vpop.f32.mrb[0].mxu0
        %v891 = vadd.f32 0.0, %v890
        %v892 = vpop.f32.mrb[0].mxu0
        %v893 = vpop.f32.mrb[0].mxu0
        %v894 = vpop.f32.mrb[0].mxu0
        %895 = vdwg.mxu0
        %897 = vrot.lane.b32.xlu0 %v891, 24
        %v898 = vpop.permute.xlu0 %897
        %vm900 = vcmask 261312
        %901 = vst.msk [vmem:[#allocation2] sm:$0xff] %vm900, %v898
        %v902 = vld [vmem:[#allocation2] sm:$0xff]
        %v903 = vpack.c.bf16 %v902, %v902
        %v904 = vld [vmem:[#allocation9] sm:$0xf]
        %v905 = vld [vmem:[#allocation9 + $0x4] sm:$0xf]
        %v906 = vld [vmem:[#allocation9 + $0x8] sm:$0xf]
        %v907 = vld [vmem:[#allocation9 + $0xc] sm:$0xf]
        %v912 = vunpack.c.l.b16 %v904
        %v913 = vunpack.c.l.b16 %v905
        %v914 = vunpack.c.l.b16 %v906
        %v915 = vunpack.c.l.b16 %v907
        %v916 = vpack.c.b16 %v913, %v912
        %v917 = vpack.c.b16 %v915, %v914
        %v921 = vsel %vm329, %v903, 0
        %923 = vmatprep.subr.bf16.mxu0 0
        %924 = vmatpush1.bf16.msra.mxu0 %v916
        %925 = vmatprep.subr.bf16.mxu0 0
        %926 = vmatpush1.bf16.msra.mxu0 %v917
        %927 = vmatprep.subr.bf16.mxu0 0
        %928 = vmatpush1.bf16.msra.mxu0 0
        %929 = vmatprep.subr.bf16.mxu0 0
        %930 = vmatpush1.bf16.msra.mxu0 0
        %931 = vmatprep.subr.bf16.mxu0 0
        %932 = vmatpush1.bf16.msra.mxu0 0
        %933 = vmatprep.subr.bf16.mxu0 0
        %934 = vmatpush1.bf16.msra.mxu0 0
        %935 = vmatprep.subr.bf16.mxu0 0
        %936 = vmatpush1.bf16.msra.mxu0 0
        %937 = vmatprep.subr.bf16.mxu0 0
        %938 = vmatpush1.bf16.msra.mxu0 0
        %939 = vmatprep.subr.bf16.mxu0 0
        %940 = vmatpush1.bf16.msra.mxu0 0
        %941 = vmatprep.subr.bf16.mxu0 0
        %942 = vmatpush1.bf16.msra.mxu0 0
        %943 = vmatprep.subr.bf16.mxu0 0
        %944 = vmatpush1.bf16.msra.mxu0 0
        %945 = vmatprep.subr.bf16.mxu0 0
        %946 = vmatpush1.bf16.msra.mxu0 0
        %947 = vmatprep.subr.bf16.mxu0 0
        %948 = vmatpush1.bf16.msra.mxu0 0
        %949 = vmatprep.subr.bf16.mxu0 0
        %950 = vmatpush1.bf16.msra.mxu0 0
        %951 = vmatprep.subr.bf16.mxu0 0
        %952 = vmatpush1.bf16.msra.mxu0 0
        %953 = vmatprep.subr.bf16.mxu0 0
        %954 = vmatpush1.bf16.msra.mxu0 0
        %955 = vmatprep.mubr.bf16.mxu0 0
        %956 = vmatmul.mubr.bf16.gmra.mrb[0].mxu0 %v921
        %v957 = vpop.f32.mrb[0].mxu0
        %v958 = vadd.f32 0.0, %v957
        %v959 = vpop.f32.mrb[0].mxu0
        %v960 = vpop.f32.mrb[0].mxu0
        %v961 = vpop.f32.mrb[0].mxu0
        %962 = vdwg.mxu0
        %v963 = vadd.f32 %v326, %v958
        %v964 = vlaneseq
        %v965 = vshrl.u32 %v964, 7
        %v966 = vsub.s32 4, %v965
        %v967 = vrot.slane %v327, %v966
        %v968 = vadd.f32 %v963, %v967
        %v969 = vsel %vm329, %v968, 0.0
        %970 = vadd.xlane.f32.xlu0 %v969
        %v971 = vpop.xlane.xlu0 %970
        %v972 = vmul.f32 %v971, %v333
        %v973 = vsub.f32 %v968, %v972
        %v974 = vmul.f32 %v973, %v973
        %v975 = vsel %vm329, %v974, 0.0
        %976 = vadd.xlane.f32.xlu0 %v975
        %v977 = vpop.xlane.xlu0 %976
        %v978 = vmul.f32 %v977, %v333
        %v979 = vadd.f32 %v978, 1e-05
        %v980 = vrsqrt.pop %v979
        %v981 = vmul.f32 %v973, %v980
        %v982 = vlaneseq
        %v983 = vshrl.u32 %v982, 7
        %v984 = vsub.s32 2, %v983
        %v985 = vrot.slane %v327, %v984
        %v986 = vmul.f32 %v981, %v985
        %v987 = vlaneseq
        %v988 = vshrl.u32 %v987, 7
        %v989 = vsub.s32 3, %v988
        %v990 = vrot.slane %v327, %v989
        %v991 = vadd.f32 %v986, %v990
        %v992 = vpack.c.bf16 %v991, %v991
        %v993 = vld [vmem:[#allocation11] sm:$0xf]
        %v994 = vld [vmem:[#allocation11 + $0x4] sm:$0xf]
        %v995 = vld [vmem:[#allocation11 + $0x8] sm:$0xf]
        %v996 = vld [vmem:[#allocation11 + $0xc] sm:$0xf]
        %v997 = vlaneseq
        %v998 = vshrl.u32 %v997, 7
        %v999 = vsub.s32 5, %v998
        %v1000 = vrot.slane %v327, %v999
        %v1005 = vunpack.c.l.b16 %v993
        %v1006 = vunpack.c.l.b16 %v994
        %v1007 = vunpack.c.l.b16 %v995
        %v1008 = vunpack.c.l.b16 %v996
        %v1009 = vpack.c.b16 %v1006, %v1005
        %v1010 = vpack.c.b16 %v1008, %v1007
        %v1014 = vsel %vm329, %v992, 0
        %1016 = vmatprep.subr.bf16.mxu0 0
        %1017 = vmatpush1.bf16.msra.mxu0 %v1009
        %1018 = vmatprep.subr.bf16.mxu0 0
        %1019 = vmatpush1.bf16.msra.mxu0 %v1010
        %1020 = vmatprep.subr.bf16.mxu0 0
        %1021 = vmatpush1.bf16.msra.mxu0 0
        %1022 = vmatprep.subr.bf16.mxu0 0
        %1023 = vmatpush1.bf16.msra.mxu0 0
        %1024 = vmatprep.subr.bf16.mxu0 0
        %1025 = vmatpush1.bf16.msra.mxu0 0
        %1026 = vmatprep.subr.bf16.mxu0 0
        %1027 = vmatpush1.bf16.msra.mxu0 0
        %1028 = vmatprep.subr.bf16.mxu0 0
        %1029 = vmatpush1.bf16.msra.mxu0 0
        %1030 = vmatprep.subr.bf16.mxu0 0
        %1031 = vmatpush1.bf16.msra.mxu0 0
        %1032 = vmatprep.subr.bf16.mxu0 0
        %1033 = vmatpush1.bf16.msra.mxu0 0
        %1034 = vmatprep.subr.bf16.mxu0 0
        %1035 = vmatpush1.bf16.msra.mxu0 0
        %1036 = vmatprep.subr.bf16.mxu0 0
        %1037 = vmatpush1.bf16.msra.mxu0 0
        %1038 = vmatprep.subr.bf16.mxu0 0
        %1039 = vmatpush1.bf16.msra.mxu0 0
        %1040 = vmatprep.subr.bf16.mxu0 0
        %1041 = vmatpush1.bf16.msra.mxu0 0
        %1042 = vmatprep.subr.bf16.mxu0 0
        %1043 = vmatpush1.bf16.msra.mxu0 0
        %1044 = vmatprep.subr.bf16.mxu0 0
        %1045 = vmatpush1.bf16.msra.mxu0 0
        %1046 = vmatprep.subr.bf16.mxu0 0
        %1047 = vmatpush1.bf16.msra.mxu0 0
        %1048 = vmatprep.mubr.bf16.mxu0 0
        %1049 = vmatmul.mubr.bf16.gmra.mrb[0].mxu0 %v1014
        %v1050 = vpop.f32.mrb[0].mxu0
        %v1051 = vadd.f32 %v1000, %v1050
        %v1052 = vpop.f32.mrb[0].mxu0
        %v1053 = vpop.f32.mrb[0].mxu0
        %v1054 = vpop.f32.mrb[0].mxu0
        %1055 = vdwg.mxu0
        %v1056 = vmax.f32 %v1051, 0.0
        %v1057 = vpack.c.bf16 %v1056, %v1056
        %v1058 = vld [vmem:[%s5] sm:$0xf]
        %v1059 = vld [vmem:[%s5 + $0x4] sm:$0xf]
        %v1060 = vld [vmem:[%s5 + $0x8] sm:$0xf]
        %v1061 = vld [vmem:[%s5 + $0xc] sm:$0xf]
        %v1062 = vlaneseq
        %v1063 = vshrl.u32 %v1062, 7
        %v1064 = vsub.s32 6, %v1063
        %v1065 = vrot.slane %v327, %v1064
        %v1070 = vunpack.c.l.b16 %v1058
        %v1071 = vunpack.c.l.b16 %v1059
        %v1072 = vunpack.c.l.b16 %v1060
        %v1073 = vunpack.c.l.b16 %v1061
        %v1074 = vpack.c.b16 %v1071, %v1070
        %v1075 = vpack.c.b16 %v1073, %v1072
        %v1079 = vsel %vm329, %v1057, 0
        %1081 = vmatprep.subr.bf16.mxu0 0
        %1082 = vmatpush1.bf16.msra.mxu0 %v1074
        %1083 = vmatprep.subr.bf16.mxu0 0
        %1084 = vmatpush1.bf16.msra.mxu0 %v1075
        %1085 = vmatprep.subr.bf16.mxu0 0
        %1086 = vmatpush1.bf16.msra.mxu0 0
        %1087 = vmatprep.subr.bf16.mxu0 0
        %1088 = vmatpush1.bf16.msra.mxu0 0
        %1089 = vmatprep.subr.bf16.mxu0 0
        %1090 = vmatpush1.bf16.msra.mxu0 0
        %1091 = vmatprep.subr.bf16.mxu0 0
        %1092 = vmatpush1.bf16.msra.mxu0 0
        %1093 = vmatprep.subr.bf16.mxu0 0
        %1094 = vmatpush1.bf16.msra.mxu0 0
        %1095 = vmatprep.subr.bf16.mxu0 0
        %1096 = vmatpush1.bf16.msra.mxu0 0
        %1097 = vmatprep.subr.bf16.mxu0 0
        %1098 = vmatpush1.bf16.msra.mxu0 0
        %1099 = vmatprep.subr.bf16.mxu0 0
        %1100 = vmatpush1.bf16.msra.mxu0 0
        %1101 = vmatprep.subr.bf16.mxu0 0
        %1102 = vmatpush1.bf16.msra.mxu0 0
        %1103 = vmatprep.subr.bf16.mxu0 0
        %1104 = vmatpush1.bf16.msra.mxu0 0
        %1105 = vmatprep.subr.bf16.mxu0 0
        %1106 = vmatpush1.bf16.msra.mxu0 0
        %1107 = vmatprep.subr.bf16.mxu0 0
        %1108 = vmatpush1.bf16.msra.mxu0 0
        %1109 = vmatprep.subr.bf16.mxu0 0
        %1110 = vmatpush1.bf16.msra.mxu0 0
        %1111 = vmatprep.subr.bf16.mxu0 0
        %1112 = vmatpush1.bf16.msra.mxu0 0
        %1113 = vmatprep.mubr.bf16.mxu0 0
        %1114 = vmatmul.mubr.bf16.gmra.mrb[0].mxu0 %v1079
        %v1115 = vpop.f32.mrb[0].mxu0
        %v1116 = vadd.f32 %v1065, %v1115
        %v1117 = vpop.f32.mrb[0].mxu0
        %v1118 = vpop.f32.mrb[0].mxu0
        %v1119 = vpop.f32.mrb[0].mxu0
        %1120 = vdwg.mxu0
        %v1121 = vadd.f32 %v968, %v1116
        %1122 = vst.msk [vmem:[%s324] sm:$0xff] %vm329, %v1121
        %s1123 = sand.u32 %s164, 1
        %s1124 = scalar_lea.sflag [#allocation5], %s1123
        %s1125 = sand.u32 %s164, 1
        %s1126 = smul.addr %s1125, 8
        %s1127 = scalar_lea.vmem [#allocation12], %s1126
        // Predicated region
        $region65: #{tpu_custom_call.1} parent=43 // pred_check
          %p1128 = pneg %p174
        $region66: #{tpu_custom_call.1} parent=43 // pred_check_branch
          %1130 = sbr.rel (%p1128) target = $region68
        $region67: #{tpu_custom_call.1} parent=43 // pred_region
          %s1132 = ssub.s32 128, 128
          %1133 = vsyncadd %s1124, %s1132
          %s1134 = smul.addr %s25, 128
          %s1135 = scalar_lea.hbm %s6, %s1134
          %s1137 = sshll.u32 %s1127, 4
          %s1138 = int_to_ptr.vmem [resolvable:$true] %s1137
          %1140 = dma.vmem_to_hbm [thread:$0]  %s1138, 128, %s1135, %s1124
        $region68: #{tpu_custom_call.1} parent=43 // pred_fallthru
          _
      $region44: #{tpu_custom_call.1} parent=5 // pred_fallthru
        _
      %p1141 = scmp.le.s32.totalorder 2, %s20
      // Predicated region
      $region69: #{tpu_custom_call.1} parent=5 // pred_check
        %p1142 = pneg %p1141
      $region70: #{tpu_custom_call.1} parent=5 // pred_check_branch
        %1144 = sbr.rel (%p1142) target = $region72
      $region71: #{tpu_custom_call.1} parent=5 // pred_region
        %s1145 = ssub.s32 %s20, 2
        // Predicated region
        $region73: #{tpu_custom_call.1} parent=71 // pred_check
          %p1146 = pneg %p180
        $region74: #{tpu_custom_call.1} parent=71 // pred_check_branch
          %1148 = sbr.rel (%p1146) target = $region76
        $region75: #{tpu_custom_call.1} parent=71 // pred_region
          %s1149 = sand.u32 %s165, 1
          %s1150 = scalar_lea.sflag [#allocation5], %s1149
          %s1151 = sand.u32 %s165, 1
          %s1152 = smul.addr %s1151, 8
          %s1153 = scalar_lea.vmem [#allocation12], %s1152
          %1154 = dma.done %s1150, 128
        $region76: #{tpu_custom_call.1} parent=71 // pred_fallthru
          _
      $region72: #{tpu_custom_call.1} parent=5 // pred_fallthru
        _
    $region6: #{tpu_custom_call.1} parent=1 // loop_footer
      %s24 = sadd.s32 1, %s20
    $region7: #{tpu_custom_call.1} parent=1 // loop_footer_branch
      %19 = sbr.rel target = $region3
    $region8: #{tpu_custom_call.1} parent=1 // loop_exit
      _
    %1155 = vsyncpa [#allocation4], 1
    %s1156 = scalar_lea.sflag [#allocation4], 1
    %1157 = vsyncpa %s1156, 1
    %1158 = vsyncpa [#allocation7], 1
    %1159 = vsyncpa [#allocation10], 1
    %1160 = vsyncpa [#allocation5], 1
    %s1161 = scalar_lea.sflag [#allocation5], 1
    %1162 = vsyncpa %s1161, 1

</llo_original>
